<compile_context>
chip_gen: v7x
topology: tpu7x:2x2x1
jax: 0.10.0
libtpu: 0.0.40
codegen_flags: <defaults>
</compile_context>

<pallas_src>
import jax
import jax.numpy as jnp
import numpy as np
from jax.experimental import pallas as pl
from jax.experimental.pallas import tpu as pltpu


def _bottleneck_kernel(x_ref, w1_ref, w2_ref, w3_ref,
                       s1_ref, b1_ref, s2_ref, b2_ref, s3_ref, b3_ref,
                       out_ref):
    _, H, W, Cin = x_ref.shape
    P = w1_ref.shape[1]
    Cout = w3_ref.shape[1]

    # ---- conv1 (1x1, bias=False) on the MXU in bf16, bn1 + relu in f32 ----
    xb = x_ref[0].reshape(H * W, Cin).astype(jnp.bfloat16)
    y1 = jnp.dot(xb, w1_ref[...], preferred_element_type=jnp.float32)
    y1 = jnp.maximum(y1 * s1_ref[...] + b1_ref[...], 0.0)
    y1b = y1.astype(jnp.bfloat16).reshape(H, W, P)

    # ---- conv2 (3x3, stride=1, padding=1) as 3 fused-K (3P) matmuls ----
    # Stack the three dh row-shifts along the channel (lane) axis:
    #   z[h, w, kh*P + c] = y1[h + kh - 1, w, c]   (zero rows outside the image)
    zrow = jnp.zeros((1, W, P), jnp.bfloat16)
    up = jnp.concatenate([zrow, y1b[:H - 1]], axis=0)      # y1[h-1, w]
    down = jnp.concatenate([y1b[1:], zrow], axis=0)        # y1[h+1, w]
    z = jnp.concatenate([up, y1b, down], axis=-1)          # (H, W, 3P)

    # dw shifts with explicit zero boundary columns (kw = 0 and kw = 2):
    zcol = jnp.zeros((H, 1, 3 * P), jnp.bfloat16)
    z_left = jnp.concatenate([zcol, z[:, :W - 1, :]], axis=1)   # z[h, w-1]
    z_right = jnp.concatenate([z[:, 1:, :], zcol], axis=1)      # z[h, w+1]

    zc = z.reshape(H * W, 3 * P)
    zl = z_left.reshape(H * W, 3 * P)
    zr = z_right.reshape(H * W, 3 * P)

    acc = jnp.dot(zc, w2_ref[1], preferred_element_type=jnp.float32)
    acc = acc + jnp.dot(zl, w2_ref[0], preferred_element_type=jnp.float32)
    acc = acc + jnp.dot(zr, w2_ref[2], preferred_element_type=jnp.float32)
    y2 = jnp.maximum(acc * s2_ref[...] + b2_ref[...], 0.0)

    # ---- conv3 (1x1, bias=False) up to 4*planes, bn3 ----
    y3 = jnp.dot(y2.astype(jnp.bfloat16), w3_ref[...],
                 preferred_element_type=jnp.float32)
    y3 = y3 * s3_ref[...] + b3_ref[...]

    # ---- identity residual (re-read x late, full f32 precision) + relu ----
    res = x_ref[0].reshape(H * W, Cout)
    out = jnp.maximum(y3 + res, 0.0)
    out_ref[0] = out.reshape(H, W, Cout).astype(out_ref.dtype)


def bottleneck_forward(x_nchw, params):
    """x_nchw: (N, Cin, H, W) float32. Returns (N, 4*planes, H, W) float32."""
    w1, w2, w3, s1, b1, s2, b2, s3, b3 = params
    N, Cin, H, W = x_nchw.shape
    P = w1.shape[1]
    Cout = w3.shape[1]
    assert Cin == Cout, "identity residual requires inplanes == planes * 4"

    x_nhwc = jnp.transpose(x_nchw, (0, 2, 3, 1)).astype(jnp.float32)

    out_nhwc = pl.pallas_call(
        _bottleneck_kernel,
        out_shape=jax.ShapeDtypeStruct((N, H, W, Cout), jnp.float32),
        grid=(N,),
        in_specs=[
            pl.BlockSpec((1, H, W, Cin), lambda n: (n, 0, 0, 0)),   # x (per image)
            pl.BlockSpec((Cin, P), lambda n: (0, 0)),               # w1
            pl.BlockSpec((3, 3 * P, P), lambda n: (0, 0, 0)),       # w2 (kw, kh*I, O)
            pl.BlockSpec((P, Cout), lambda n: (0, 0)),              # w3
            pl.BlockSpec((1, P), lambda n: (0, 0)),                 # s1
            pl.BlockSpec((1, P), lambda n: (0, 0)),                 # b1
            pl.BlockSpec((1, P), lambda n: (0, 0)),                 # s2
            pl.BlockSpec((1, P), lambda n: (0, 0)),                 # b2
            pl.BlockSpec((1, Cout), lambda n: (0, 0)),              # s3
            pl.BlockSpec((1, Cout), lambda n: (0, 0)),              # b3
        ],
        out_specs=pl.BlockSpec((1, H, W, Cout), lambda n: (n, 0, 0, 0)),
        compiler_params=pltpu.CompilerParams(
            dimension_semantics=("parallel",),
            vmem_limit_bytes=48 * 1024 * 1024),
    )(x_nhwc, w1, w2, w3, s1, b1, s2, b2, s3, b3)

    return jnp.transpose(out_nhwc, (0, 3, 1, 2))


def make_params(key, inplanes, planes, eps=1e-5):
    """Deterministic synthetic weights matching the PyTorch module's shapes."""
    expansion = 4
    ks = jax.random.split(key, 12)

    # PyTorch conv weights (OIHW), bias=False.
    w1_pt = 0.1 * jax.random.normal(ks[0], (planes, inplanes, 1, 1), jnp.float32)
    w2_pt = 0.1 * jax.random.normal(ks[1], (planes, planes, 3, 3), jnp.float32)
    w3_pt = 0.1 * jax.random.normal(ks[2], (planes * expansion, planes, 1, 1),
                                    jnp.float32)

    def bn(kg, kb, km, kv, c):
        gamma = 1.0 + 0.1 * jax.random.normal(kg, (c,), jnp.float32)
        beta = 0.1 * jax.random.normal(kb, (c,), jnp.float32)
        mean = 0.1 * jax.random.normal(km, (c,), jnp.float32)
        var = 0.5 + jnp.abs(jax.random.normal(kv, (c,), jnp.float32)) * 0.5
        scale = gamma / jnp.sqrt(var + eps)
        bias = beta - mean * scale
        return (gamma, beta, mean, var), scale, bias

    bn1_raw, s1, b1 = bn(ks[3], ks[4], ks[5], ks[6], planes)
    bn2_raw, s2, b2 = bn(ks[7], ks[8], ks[9], ks[10], planes)
    bn3_key = jax.random.split(ks[11], 4)
    bn3_raw, s3, b3 = bn(bn3_key[0], bn3_key[1], bn3_key[2], bn3_key[3],
                         planes * expansion)

    # Kernel-side weight layouts (bf16 for the MXU):
    #   1x1 convs -> (Cin, Cout); 3x3 -> (kw, kh*Cin, Cout) so each dw slice is a
    #   fused-K (3P) matmul against the dh-stacked activation slab.
    w1 = jnp.transpose(w1_pt[:, :, 0, 0], (1, 0)).astype(jnp.bfloat16)
    w2 = jnp.transpose(w2_pt, (3, 2, 1, 0)).reshape(
        3, 3 * planes, planes).astype(jnp.bfloat16)
    w3 = jnp.transpose(w3_pt[:, :, 0, 0], (1, 0)).astype(jnp.bfloat16)

    kernel_params = (w1, w2, w3,
                     s1.reshape(1, -1), b1.reshape(1, -1),
                     s2.reshape(1, -1), b2.reshape(1, -1),
                     s3.reshape(1, -1), b3.reshape(1, -1))
    pt_params = (w1_pt, w2_pt, w3_pt, bn1_raw, bn2_raw, bn3_raw)
    return kernel_params, pt_params


def reference_forward(x_nchw, pt_params, eps=1e-5):
    """Pure-JAX f32 reference reproducing the PyTorch forward (eval-mode BN)."""
    w1_pt, w2_pt, w3_pt, bn1, bn2, bn3 = pt_params
    x = jnp.transpose(x_nchw, (0, 2, 3, 1))  # NHWC

    def conv(inp, w_pt, pad):
        w_hwio = jnp.transpose(w_pt, (2, 3, 1, 0))
        return jax.lax.conv_general_dilated(
            inp, w_hwio, (1, 1), pad,
            dimension_numbers=("NHWC", "HWIO", "NHWC"))

    def bn_apply(y, raw):
        gamma, beta, mean, var = raw
        return (y - mean) / jnp.sqrt(var + eps) * gamma + beta

    out = jax.nn.relu(bn_apply(conv(x, w1_pt, "VALID"), bn1))
    out = jax.nn.relu(bn_apply(conv(out, w2_pt, [(1, 1), (1, 1)]), bn2))
    out = bn_apply(conv(out, w3_pt, "VALID"), bn3)
    out = jax.nn.relu(out + x)
    return jnp.transpose(out, (0, 3, 1, 2))


if __name__ == "__main__":
    # Small shapes consistent with the module: inplanes = planes * expansion
    # so that downsample=None (identity residual) is valid.
    N, H, W = 2, 16, 16
    planes = 4
    inplanes = planes * 4  # 16

    key = jax.random.PRNGKey(0)
    kx, kp = jax.random.split(key)
    x = jax.random.normal(kx, (N, inplanes, H, W), jnp.float32)

    kernel_params, pt_params = make_params(kp, inplanes, planes)

    out = bottleneck_forward(x, kernel_params)
    out = jax.block_until_ready(out)

    ref = jax.block_until_ready(reference_forward(x, pt_params))
    # bf16 MXU operands with f32 accumulation -> compare with bf16-level tolerance.
    np.testing.assert_allclose(np.asarray(out), np.asarray(ref),
                               rtol=3e-2, atol=3e-2)
    print("KERNEL_OK")
</pallas_src>

<mosaic_0001>
module attributes {stable_mosaic.version = 11 : i64} {
  func.func @_bottleneck_kernel(%arg0: i32, %arg1: memref<1x16x16x16xf32, #tpu.memory_space<vmem>>, %arg2: memref<16x4xbf16, #tpu.memory_space<vmem>>, %arg3: memref<3x12x4xbf16, #tpu.memory_space<vmem>>, %arg4: memref<4x16xbf16, #tpu.memory_space<vmem>>, %arg5: memref<1x4xf32, #tpu.memory_space<vmem>>, %arg6: memref<1x4xf32, #tpu.memory_space<vmem>>, %arg7: memref<1x4xf32, #tpu.memory_space<vmem>>, %arg8: memref<1x4xf32, #tpu.memory_space<vmem>>, %arg9: memref<1x16xf32, #tpu.memory_space<vmem>>, %arg10: memref<1x16xf32, #tpu.memory_space<vmem>>, %arg11: memref<1x16x16x16xf32, #tpu.memory_space<vmem>>) attributes {dimension_semantics = [#tpu.dimension_semantics<parallel>], iteration_bounds = array<i64: 2>, scalar_prefetch = 0 : i64, scratch_operands = 0 : i64, tpu.core_type = #tpu.core_type<tc>, window_params = [{transform_indices = @transform_0, window_bounds = array<i64: 1, 16, 16, 16>}, {pipeline_mode = #tpu.pipeline_mode<synchronous>, transform_indices = @transform_1, window_bounds = array<i64: 16, 4>}, {pipeline_mode = #tpu.pipeline_mode<synchronous>, transform_indices = @transform_2, window_bounds = array<i64: 3, 12, 4>}, {pipeline_mode = #tpu.pipeline_mode<synchronous>, transform_indices = @transform_3, window_bounds = array<i64: 4, 16>}, {pipeline_mode = #tpu.pipeline_mode<synchronous>, transform_indices = @transform_4, window_bounds = array<i64: 1, 4>}, {pipeline_mode = #tpu.pipeline_mode<synchronous>, transform_indices = @transform_5, window_bounds = array<i64: 1, 4>}, {pipeline_mode = #tpu.pipeline_mode<synchronous>, transform_indices = @transform_6, window_bounds = array<i64: 1, 4>}, {pipeline_mode = #tpu.pipeline_mode<synchronous>, transform_indices = @transform_7, window_bounds = array<i64: 1, 4>}, {pipeline_mode = #tpu.pipeline_mode<synchronous>, transform_indices = @transform_8, window_bounds = array<i64: 1, 16>}, {pipeline_mode = #tpu.pipeline_mode<synchronous>, transform_indices = @transform_9, window_bounds = array<i64: 1, 16>}, {transform_indices = @transform_10, window_bounds = array<i64: 1, 16, 16, 16>}]} {
    %c0 = arith.constant 0 : index
    %c0_0 = arith.constant 0 : index
    %c0_1 = arith.constant 0 : index
    %c0_2 = arith.constant 0 : index
    %0 = vector.load %arg1[%c0, %c0_0, %c0_1, %c0_2] : memref<1x16x16x16xf32, #tpu.memory_space<vmem>>, vector<1x16x16x16xf32>
    %1 = vector.shape_cast %0 : vector<1x16x16x16xf32> to vector<16x16x16xf32>
    %2 = vector.shape_cast %1 : vector<16x16x16xf32> to vector<256x16xf32>
    %3 = arith.truncf %2 : vector<256x16xf32> to vector<256x16xbf16>
    %c0_3 = arith.constant 0 : index
    %c0_4 = arith.constant 0 : index
    %4 = vector.load %arg2[%c0_3, %c0_4] : memref<16x4xbf16, #tpu.memory_space<vmem>>, vector<16x4xbf16>
    %cst = arith.constant dense<0.000000e+00> : vector<256x4xf32>
    %5 = tpu.matmul %3, %4, %cst {dimension_numbers = #tpu.dot_dimension_numbers<[1], [0], [0], [1], [0, 0, 1, 1], [], []>} : vector<256x16xbf16>, vector<16x4xbf16>, vector<256x4xf32> -> vector<256x4xf32>
    %c0_5 = arith.constant 0 : index
    %c0_6 = arith.constant 0 : index
    %6 = vector.load %arg5[%c0_5, %c0_6] : memref<1x4xf32, #tpu.memory_space<vmem>>, vector<1x4xf32>
    %7 = vector.broadcast %6 : vector<1x4xf32> to vector<256x4xf32>
    %8 = arith.mulf %5, %7 : vector<256x4xf32>
    %c0_7 = arith.constant 0 : index
    %c0_8 = arith.constant 0 : index
    %9 = vector.load %arg6[%c0_7, %c0_8] : memref<1x4xf32, #tpu.memory_space<vmem>>, vector<1x4xf32>
    %10 = vector.broadcast %9 : vector<1x4xf32> to vector<256x4xf32>
    %11 = arith.addf %8, %10 : vector<256x4xf32>
    %cst_9 = arith.constant 0.000000e+00 : f32
    %12 = vector.broadcast %cst_9 : f32 to vector<256x4xf32>
    %13 = arith.maximumf %11, %12 : vector<256x4xf32>
    %14 = arith.truncf %13 : vector<256x4xf32> to vector<256x4xbf16>
    %15 = vector.shape_cast %14 : vector<256x4xbf16> to vector<16x16x4xbf16>
    %cst_10 = arith.constant 0.000000e+00 : bf16
    %16 = vector.broadcast %cst_10 : bf16 to vector<1x16x4xbf16>
    %17 = vector.extract_strided_slice %15 {offsets = [0, 0, 0], sizes = [15, 16, 4], strides = [1, 1, 1]} : vector<16x16x4xbf16> to vector<15x16x4xbf16>
    %18 = tpu.concatenate %16, %17 in 0 : vector<1x16x4xbf16>, vector<15x16x4xbf16> -> vector<16x16x4xbf16>
    %19 = vector.extract_strided_slice %15 {offsets = [1, 0, 0], sizes = [15, 16, 4], strides = [1, 1, 1]} : vector<16x16x4xbf16> to vector<15x16x4xbf16>
    %20 = tpu.concatenate %19, %16 in 0 : vector<15x16x4xbf16>, vector<1x16x4xbf16> -> vector<16x16x4xbf16>
    %21 = tpu.concatenate %18, %15, %20 in 2 : vector<16x16x4xbf16>, vector<16x16x4xbf16>, vector<16x16x4xbf16> -> vector<16x16x12xbf16>
    %cst_11 = arith.constant 0.000000e+00 : bf16
    %22 = vector.broadcast %cst_11 : bf16 to vector<16x1x12xbf16>
    %23 = vector.extract_strided_slice %21 {offsets = [0, 0, 0], sizes = [16, 15, 12], strides = [1, 1, 1]} : vector<16x16x12xbf16> to vector<16x15x12xbf16>
    %24 = tpu.concatenate %22, %23 in 1 : vector<16x1x12xbf16>, vector<16x15x12xbf16> -> vector<16x16x12xbf16>
    %25 = vector.extract_strided_slice %21 {offsets = [0, 1, 0], sizes = [16, 15, 12], strides = [1, 1, 1]} : vector<16x16x12xbf16> to vector<16x15x12xbf16>
    %26 = tpu.concatenate %25, %22 in 1 : vector<16x15x12xbf16>, vector<16x1x12xbf16> -> vector<16x16x12xbf16>
    %27 = vector.shape_cast %21 : vector<16x16x12xbf16> to vector<256x12xbf16>
    %28 = vector.shape_cast %24 : vector<16x16x12xbf16> to vector<256x12xbf16>
    %29 = vector.shape_cast %26 : vector<16x16x12xbf16> to vector<256x12xbf16>
    %c1 = arith.constant 1 : index
    %c0_12 = arith.constant 0 : index
    %c0_13 = arith.constant 0 : index
    %30 = vector.load %arg3[%c1, %c0_12, %c0_13] : memref<3x12x4xbf16, #tpu.memory_space<vmem>>, vector<1x12x4xbf16>
    %31 = vector.shape_cast %30 : vector<1x12x4xbf16> to vector<12x4xbf16>
    %cst_14 = arith.constant dense<0.000000e+00> : vector<256x4xf32>
    %32 = tpu.matmul %27, %31, %cst_14 {dimension_numbers = #tpu.dot_dimension_numbers<[1], [0], [0], [1], [0, 0, 1, 1], [], []>} : vector<256x12xbf16>, vector<12x4xbf16>, vector<256x4xf32> -> vector<256x4xf32>
    %c0_15 = arith.constant 0 : index
    %c0_16 = arith.constant 0 : index
    %c0_17 = arith.constant 0 : index
    %33 = vector.load %arg3[%c0_15, %c0_16, %c0_17] : memref<3x12x4xbf16, #tpu.memory_space<vmem>>, vector<1x12x4xbf16>
    %34 = vector.shape_cast %33 : vector<1x12x4xbf16> to vector<12x4xbf16>
    %cst_18 = arith.constant dense<0.000000e+00> : vector<256x4xf32>
    %35 = tpu.matmul %28, %34, %cst_18 {dimension_numbers = #tpu.dot_dimension_numbers<[1], [0], [0], [1], [0, 0, 1, 1], [], []>} : vector<256x12xbf16>, vector<12x4xbf16>, vector<256x4xf32> -> vector<256x4xf32>
    %36 = arith.addf %32, %35 : vector<256x4xf32>
    %c2 = arith.constant 2 : index
    %c0_19 = arith.constant 0 : index
    %c0_20 = arith.constant 0 : index
    %37 = vector.load %arg3[%c2, %c0_19, %c0_20] : memref<3x12x4xbf16, #tpu.memory_space<vmem>>, vector<1x12x4xbf16>
    %38 = vector.shape_cast %37 : vector<1x12x4xbf16> to vector<12x4xbf16>
    %cst_21 = arith.constant dense<0.000000e+00> : vector<256x4xf32>
    %39 = tpu.matmul %29, %38, %cst_21 {dimension_numbers = #tpu.dot_dimension_numbers<[1], [0], [0], [1], [0, 0, 1, 1], [], []>} : vector<256x12xbf16>, vector<12x4xbf16>, vector<256x4xf32> -> vector<256x4xf32>
    %40 = arith.addf %36, %39 : vector<256x4xf32>
    %c0_22 = arith.constant 0 : index
    %c0_23 = arith.constant 0 : index
    %41 = vector.load %arg7[%c0_22, %c0_23] : memref<1x4xf32, #tpu.memory_space<vmem>>, vector<1x4xf32>
    %42 = vector.broadcast %41 : vector<1x4xf32> to vector<256x4xf32>
    %43 = arith.mulf %40, %42 : vector<256x4xf32>
    %c0_24 = arith.constant 0 : index
    %c0_25 = arith.constant 0 : index
    %44 = vector.load %arg8[%c0_24, %c0_25] : memref<1x4xf32, #tpu.memory_space<vmem>>, vector<1x4xf32>
    %45 = vector.broadcast %44 : vector<1x4xf32> to vector<256x4xf32>
    %46 = arith.addf %43, %45 : vector<256x4xf32>
    %cst_26 = arith.constant 0.000000e+00 : f32
    %47 = vector.broadcast %cst_26 : f32 to vector<256x4xf32>
    %48 = arith.maximumf %46, %47 : vector<256x4xf32>
    %49 = arith.truncf %48 : vector<256x4xf32> to vector<256x4xbf16>
    %c0_27 = arith.constant 0 : index
    %c0_28 = arith.constant 0 : index
    %50 = vector.load %arg4[%c0_27, %c0_28] : memref<4x16xbf16, #tpu.memory_space<vmem>>, vector<4x16xbf16>
    %cst_29 = arith.constant dense<0.000000e+00> : vector<256x16xf32>
    %51 = tpu.matmul %49, %50, %cst_29 {dimension_numbers = #tpu.dot_dimension_numbers<[1], [0], [0], [1], [0, 0, 1, 1], [], []>} : vector<256x4xbf16>, vector<4x16xbf16>, vector<256x16xf32> -> vector<256x16xf32>
    %c0_30 = arith.constant 0 : index
    %c0_31 = arith.constant 0 : index
    %52 = vector.load %arg9[%c0_30, %c0_31] : memref<1x16xf32, #tpu.memory_space<vmem>>, vector<1x16xf32>
    %53 = vector.broadcast %52 : vector<1x16xf32> to vector<256x16xf32>
    %54 = arith.mulf %51, %53 : vector<256x16xf32>
    %c0_32 = arith.constant 0 : index
    %c0_33 = arith.constant 0 : index
    %55 = vector.load %arg10[%c0_32, %c0_33] : memref<1x16xf32, #tpu.memory_space<vmem>>, vector<1x16xf32>
    %56 = vector.broadcast %55 : vector<1x16xf32> to vector<256x16xf32>
    %57 = arith.addf %54, %56 : vector<256x16xf32>
    %c0_34 = arith.constant 0 : index
    %c0_35 = arith.constant 0 : index
    %c0_36 = arith.constant 0 : index
    %c0_37 = arith.constant 0 : index
    %58 = vector.load %arg1[%c0_34, %c0_35, %c0_36, %c0_37] : memref<1x16x16x16xf32, #tpu.memory_space<vmem>>, vector<1x16x16x16xf32>
    %59 = vector.shape_cast %58 : vector<1x16x16x16xf32> to vector<16x16x16xf32>
    %60 = vector.shape_cast %59 : vector<16x16x16xf32> to vector<256x16xf32>
    %61 = arith.addf %57, %60 : vector<256x16xf32>
    %cst_38 = arith.constant 0.000000e+00 : f32
    %62 = vector.broadcast %cst_38 : f32 to vector<256x16xf32>
    %63 = arith.maximumf %61, %62 : vector<256x16xf32>
    %64 = vector.shape_cast %63 : vector<256x16xf32> to vector<16x16x16xf32>
    %c0_39 = arith.constant 0 : index
    %c0_40 = arith.constant 0 : index
    %c0_41 = arith.constant 0 : index
    %c0_42 = arith.constant 0 : index
    %65 = vector.load %arg11[%c0_39, %c0_40, %c0_41, %c0_42] : memref<1x16x16x16xf32, #tpu.memory_space<vmem>>, vector<1x16x16x16xf32>
    %66 = vector.shape_cast %65 : vector<1x16x16x16xf32> to vector<16x16x16xf32>
    %67 = vector.shape_cast %64 : vector<16x16x16xf32> to vector<1x16x16x16xf32>
    tpu.vector_store %arg11[%c0_39, %c0_40, %c0_41, %c0_42], %67 {strides = array<i32>} : memref<1x16x16x16xf32, #tpu.memory_space<vmem>>, vector<1x16x16x16xf32>,
    return
  }
  func.func @transform_0(%arg0: i32) -> (i32, i32, i32, i32) {
    %c0_i32 = arith.constant 0 : i32
    %c0_i32_0 = arith.constant 0 : i32
    %c0_i32_1 = arith.constant 0 : i32
    %c0_i32_2 = arith.constant 0 : i32
    return %arg0, %c0_i32, %c0_i32_0, %c0_i32_1 : i32, i32, i32, i32
  }
  func.func @transform_1(%arg0: i32) -> (i32, i32) {
    %c0_i32 = arith.constant 0 : i32
    %c0_i32_0 = arith.constant 0 : i32
    %c0_i32_1 = arith.constant 0 : i32
    return %c0_i32, %c0_i32_0 : i32, i32
  }
  func.func @transform_2(%arg0: i32) -> (i32, i32, i32) {
    %c0_i32 = arith.constant 0 : i32
    %c0_i32_0 = arith.constant 0 : i32
    %c0_i32_1 = arith.constant 0 : i32
    %c0_i32_2 = arith.constant 0 : i32
    return %c0_i32, %c0_i32_0, %c0_i32_1 : i32, i32, i32
  }
  func.func @transform_3(%arg0: i32) -> (i32, i32) {
    %c0_i32 = arith.constant 0 : i32
    %c0_i32_0 = arith.constant 0 : i32
    %c0_i32_1 = arith.constant 0 : i32
    return %c0_i32, %c0_i32_0 : i32, i32
  }
  func.func @transform_4(%arg0: i32) -> (i32, i32) {
    %c0_i32 = arith.constant 0 : i32
    %c0_i32_0 = arith.constant 0 : i32
    %c0_i32_1 = arith.constant 0 : i32
    return %c0_i32, %c0_i32_0 : i32, i32
  }
  func.func @transform_5(%arg0: i32) -> (i32, i32) {
    %c0_i32 = arith.constant 0 : i32
    %c0_i32_0 = arith.constant 0 : i32
    %c0_i32_1 = arith.constant 0 : i32
    return %c0_i32, %c0_i32_0 : i32, i32
  }
  func.func @transform_6(%arg0: i32) -> (i32, i32) {
    %c0_i32 = arith.constant 0 : i32
    %c0_i32_0 = arith.constant 0 : i32
    %c0_i32_1 = arith.constant 0 : i32
    return %c0_i32, %c0_i32_0 : i32, i32
  }
  func.func @transform_7(%arg0: i32) -> (i32, i32) {
    %c0_i32 = arith.constant 0 : i32
    %c0_i32_0 = arith.constant 0 : i32
    %c0_i32_1 = arith.constant 0 : i32
    return %c0_i32, %c0_i32_0 : i32, i32
  }
  func.func @transform_8(%arg0: i32) -> (i32, i32) {
    %c0_i32 = arith.constant 0 : i32
    %c0_i32_0 = arith.constant 0 : i32
    %c0_i32_1 = arith.constant 0 : i32
    return %c0_i32, %c0_i32_0 : i32, i32
  }
  func.func @transform_9(%arg0: i32) -> (i32, i32) {
    %c0_i32 = arith.constant 0 : i32
    %c0_i32_0 = arith.constant 0 : i32
    %c0_i32_1 = arith.constant 0 : i32
    return %c0_i32, %c0_i32_0 : i32, i32
  }
  func.func @transform_10(%arg0: i32) -> (i32, i32, i32, i32) {
    %c0_i32 = arith.constant 0 : i32
    %c0_i32_0 = arith.constant 0 : i32
    %c0_i32_1 = arith.constant 0 : i32
    %c0_i32_2 = arith.constant 0 : i32
    return %arg0, %c0_i32, %c0_i32_0, %c0_i32_1 : i32, i32, i32, i32
  }
}

</mosaic_0001>

<llo_original>
// kernel: tpu_custom_call.1
$region0: #{tpu_custom_call.1}
  #allocation0 [shape = 'u32[]', space=smem, size = 0x4, offset = 0x4, fixed_abs, tag = 'smem constant byte address 0x4 - core index']
  #allocation1 [shape = 'u32[144,128]{1,0:T(1,128)}', space=vmem, size = 0x12000, scoped, tag = 'internal scratch']
  %s0 = inlined_call_operand.hbm [shape: f32[2,16,16,16], index: 0, kind: input, shape index: {}]
  %s1 = inlined_call_operand.vmem [shape: bf16[16,4], index: 1, kind: input, shape index: {}]
  %s2 = inlined_call_operand.vmem [shape: bf16[3,12,4], index: 2, kind: input, shape index: {}]
  %s3 = inlined_call_operand.vmem [shape: bf16[4,16], index: 3, kind: input, shape index: {}]
  %s4 = inlined_call_operand.vmem [shape: f32[1,4], index: 4, kind: input, shape index: {}]
  %s5 = inlined_call_operand.vmem [shape: f32[1,4], index: 5, kind: input, shape index: {}]
  %s6 = inlined_call_operand.vmem [shape: f32[1,4], index: 6, kind: input, shape index: {}]
  %s7 = inlined_call_operand.vmem [shape: f32[1,4], index: 7, kind: input, shape index: {}]
  %s8 = inlined_call_operand.vmem [shape: f32[1,16], index: 8, kind: input, shape index: {}]
  %s9 = inlined_call_operand.vmem [shape: f32[1,16], index: 9, kind: input, shape index: {}]
  %s10 = inlined_call_operand.hbm [shape: f32[2,16,16,16], index: 10, kind: output, shape index: {}]
  %s11 = sld [smem:[#allocation0]]
  $region77: #{tpu_custom_call.1} parent=0
    _
  %s13 = ssub.s32 1, %s11
  %s14 = scalar_select 0, %s13, %s11
  $region1: #{tpu_custom_call.1} parent=0
    #allocation2 [shape = 'u8[262144]{0}', space=vmem, size = 0x40000, scoped, tag = 'input window, operand 0']
    #allocation3 [shape = 's32[2]{0}', space=sflag, size = 0x8, scoped, tag = 'scoped memory for tpu_custom_call.1']
    #allocation4 [shape = 's32[2]{0}', space=sflag, size = 0x8, scoped, tag = 'scoped memory for tpu_custom_call.1']
    #allocation5 [shape = 'u8[262144]{0}', space=vmem, size = 0x40000, scoped, tag = 'output window, operand 0']
    %15 = vsyncpa [#allocation3], 0
    %s16 = scalar_lea.sflag [#allocation3], 1
    %17 = vsyncpa %s16, 0
    %18 = vsyncpa [#allocation4], 0
    %s19 = scalar_lea.sflag [#allocation4], 1
    %20 = vsyncpa %s19, 0
    loop: start=0, step=1, limit=4
    $region2: #{tpu_custom_call.1} parent=1 // loop_pre_header
      _
    $region3: #{tpu_custom_call.1} parent=1 // loop_header
      %s22 = sphi 0, %s26
      %p23 = scmp.ge.s32.totalorder %s22, 4
      %s32 = sphi 0, %s34
      %s35 = sphi 0, %s32
      %s36 = sphi 0, %s35
      %s52 = sphi 0, %s36
      %s56 = sphi 0, %s56
      %s58 = sphi 0, %s56
      %s59 = sphi 0, %s58
      %s73 = sphi 0, %s59
      %s77 = sphi 0, %s77
      %s79 = sphi 0, %s77
      %s80 = sphi 0, %s79
      %s94 = sphi 0, %s80
      %s98 = sphi 0, %s98
      %s100 = sphi 0, %s98
      %s101 = sphi 0, %s100
      %s115 = sphi 0, %s101
      %s119 = sphi 0, %s119
      %s121 = sphi 0, %s119
      %s122 = sphi 0, %s121
      %s136 = sphi 0, %s122
      %s140 = sphi 0, %s140
      %s142 = sphi 0, %s140
      %s143 = sphi 0, %s142
      %s157 = sphi 0, %s143
      %s161 = sphi 0, %s161
      %s163 = sphi 0, %s161
      %s164 = sphi 0, %s163
      %s178 = sphi 0, %s164
      %s182 = sphi 0, %s182
      %s184 = sphi 0, %s182
      %s185 = sphi 0, %s184
      %s199 = sphi 0, %s185
      %s203 = sphi 0, %s203
      %s205 = sphi 0, %s203
      %s206 = sphi 0, %s205
      %s220 = sphi 0, %s206
      %s224 = sphi 0, %s224
      %s226 = sphi 0, %s224
      %s227 = sphi 0, %s226
      %s241 = sphi 0, %s227
      %s247 = sphi 0, %s249
      %s250 = sphi 0, %s247
      %s251 = sphi 0, %s250
      %s267 = sphi 0, %s251
    $region4: #{tpu_custom_call.1} parent=1 // loop_header_branch
      %25 = sbr.rel (%p23) target = $region8
    $region5: #{tpu_custom_call.1} parent=1 // loop_body
      %s27 = ssub.s32 %s22, 1
      %s28 = ssub.s32 %s22, 2
      %s29 = sadd.s32 %s22, 1
      %s30 = ssub.s32 %s22, %s29
      %p31 = scmp.eq.s32.totalorder %s30, 0
      %s33 = sadd.s32 %s32, 1
      %s34 = scalar_select %p31, %s32, %s33
      %p37 = pneg %p31
      %p38 = scmp.eq.s32.totalorder %s22, 1
      %p39 = por %p37, %p38
      %p40 = scmp.ne.s32.totalorder %s32, %s35
      %p41 = scmp.eq.s32.totalorder %s22, 0
      %p42 = por %p40, %p41
      %p43 = scmp.ne.s32.totalorder %s32, %s35
      %p44 = scmp.eq.s32.totalorder %s27, 1
      %p45 = por %p43, %p44
      %p46 = scmp.ne.s32.totalorder %s35, %s36
      %p47 = scmp.eq.s32.totalorder %s27, 0
      %p48 = por %p46, %p47
      %p49 = scmp.ne.s32.totalorder %s35, %s36
      %p50 = scmp.eq.s32.totalorder %s28, 1
      %p51 = por %p49, %p50
      %p53 = scmp.ne.s32.totalorder %s36, %s52
      %p54 = scmp.eq.s32.totalorder %s28, 0
      %p55 = por %p53, %p54
      %s57 = sadd.s32 %s56, 1
      %p60 = scmp.eq.s32.totalorder %s22, 1
      %p61 = scmp.ne.s32.totalorder %s56, %s58
      %p62 = scmp.eq.s32.totalorder %s22, 0
      %p63 = por %p61, %p62
      %p64 = scmp.ne.s32.totalorder %s56, %s58
      %p65 = scmp.eq.s32.totalorder %s27, 1
      %p66 = por %p64, %p65
      %p67 = scmp.ne.s32.totalorder %s58, %s59
      %p68 = scmp.eq.s32.totalorder %s27, 0
      %p69 = por %p67, %p68
      %p70 = scmp.ne.s32.totalorder %s58, %s59
      %p71 = scmp.eq.s32.totalorder %s28, 1
      %p72 = por %p70, %p71
      %p74 = scmp.ne.s32.totalorder %s59, %s73
      %p75 = scmp.eq.s32.totalorder %s28, 0
      %p76 = por %p74, %p75
      %s78 = sadd.s32 %s77, 1
      %p81 = scmp.eq.s32.totalorder %s22, 1
      %p82 = scmp.ne.s32.totalorder %s77, %s79
      %p83 = scmp.eq.s32.totalorder %s22, 0
      %p84 = por %p82, %p83
      %p85 = scmp.ne.s32.totalorder %s77, %s79
      %p86 = scmp.eq.s32.totalorder %s27, 1
      %p87 = por %p85, %p86
      %p88 = scmp.ne.s32.totalorder %s79, %s80
      %p89 = scmp.eq.s32.totalorder %s27, 0
      %p90 = por %p88, %p89
      %p91 = scmp.ne.s32.totalorder %s79, %s80
      %p92 = scmp.eq.s32.totalorder %s28, 1
      %p93 = por %p91, %p92
      %p95 = scmp.ne.s32.totalorder %s80, %s94
      %p96 = scmp.eq.s32.totalorder %s28, 0
      %p97 = por %p95, %p96
      %s99 = sadd.s32 %s98, 1
      %p102 = scmp.eq.s32.totalorder %s22, 1
      %p103 = scmp.ne.s32.totalorder %s98, %s100
      %p104 = scmp.eq.s32.totalorder %s22, 0
      %p105 = por %p103, %p104
      %p106 = scmp.ne.s32.totalorder %s98, %s100
      %p107 = scmp.eq.s32.totalorder %s27, 1
      %p108 = por %p106, %p107
      %p109 = scmp.ne.s32.totalorder %s100, %s101
      %p110 = scmp.eq.s32.totalorder %s27, 0
      %p111 = por %p109, %p110
      %p112 = scmp.ne.s32.totalorder %s100, %s101
      %p113 = scmp.eq.s32.totalorder %s28, 1
      %p114 = por %p112, %p113
      %p116 = scmp.ne.s32.totalorder %s101, %s115
      %p117 = scmp.eq.s32.totalorder %s28, 0
      %p118 = por %p116, %p117
      %s120 = sadd.s32 %s119, 1
      %p123 = scmp.eq.s32.totalorder %s22, 1
      %p124 = scmp.ne.s32.totalorder %s119, %s121
      %p125 = scmp.eq.s32.totalorder %s22, 0
      %p126 = por %p124, %p125
      %p127 = scmp.ne.s32.totalorder %s119, %s121
      %p128 = scmp.eq.s32.totalorder %s27, 1
      %p129 = por %p127, %p128
      %p130 = scmp.ne.s32.totalorder %s121, %s122
      %p131 = scmp.eq.s32.totalorder %s27, 0
      %p132 = por %p130, %p131
      %p133 = scmp.ne.s32.totalorder %s121, %s122
      %p134 = scmp.eq.s32.totalorder %s28, 1
      %p135 = por %p133, %p134
      %p137 = scmp.ne.s32.totalorder %s122, %s136
      %p138 = scmp.eq.s32.totalorder %s28, 0
      %p139 = por %p137, %p138
      %s141 = sadd.s32 %s140, 1
      %p144 = scmp.eq.s32.totalorder %s22, 1
      %p145 = scmp.ne.s32.totalorder %s140, %s142
      %p146 = scmp.eq.s32.totalorder %s22, 0
      %p147 = por %p145, %p146
      %p148 = scmp.ne.s32.totalorder %s140, %s142
      %p149 = scmp.eq.s32.totalorder %s27, 1
      %p150 = por %p148, %p149
      %p151 = scmp.ne.s32.totalorder %s142, %s143
      %p152 = scmp.eq.s32.totalorder %s27, 0
      %p153 = por %p151, %p152
      %p154 = scmp.ne.s32.totalorder %s142, %s143
      %p155 = scmp.eq.s32.totalorder %s28, 1
      %p156 = por %p154, %p155
      %p158 = scmp.ne.s32.totalorder %s143, %s157
      %p159 = scmp.eq.s32.totalorder %s28, 0
      %p160 = por %p158, %p159
      %s162 = sadd.s32 %s161, 1
      %p165 = scmp.eq.s32.totalorder %s22, 1
      %p166 = scmp.ne.s32.totalorder %s161, %s163
      %p167 = scmp.eq.s32.totalorder %s22, 0
      %p168 = por %p166, %p167
      %p169 = scmp.ne.s32.totalorder %s161, %s163
      %p170 = scmp.eq.s32.totalorder %s27, 1
      %p171 = por %p169, %p170
      %p172 = scmp.ne.s32.totalorder %s163, %s164
      %p173 = scmp.eq.s32.totalorder %s27, 0
      %p174 = por %p172, %p173
      %p175 = scmp.ne.s32.totalorder %s163, %s164
      %p176 = scmp.eq.s32.totalorder %s28, 1
      %p177 = por %p175, %p176
      %p179 = scmp.ne.s32.totalorder %s164, %s178
      %p180 = scmp.eq.s32.totalorder %s28, 0
      %p181 = por %p179, %p180
      %s183 = sadd.s32 %s182, 1
      %p186 = scmp.eq.s32.totalorder %s22, 1
      %p187 = scmp.ne.s32.totalorder %s182, %s184
      %p188 = scmp.eq.s32.totalorder %s22, 0
      %p189 = por %p187, %p188
      %p190 = scmp.ne.s32.totalorder %s182, %s184
      %p191 = scmp.eq.s32.totalorder %s27, 1
      %p192 = por %p190, %p191
      %p193 = scmp.ne.s32.totalorder %s184, %s185
      %p194 = scmp.eq.s32.totalorder %s27, 0
      %p195 = por %p193, %p194
      %p196 = scmp.ne.s32.totalorder %s184, %s185
      %p197 = scmp.eq.s32.totalorder %s28, 1
      %p198 = por %p196, %p197
      %p200 = scmp.ne.s32.totalorder %s185, %s199
      %p201 = scmp.eq.s32.totalorder %s28, 0
      %p202 = por %p200, %p201
      %s204 = sadd.s32 %s203, 1
      %p207 = scmp.eq.s32.totalorder %s22, 1
      %p208 = scmp.ne.s32.totalorder %s203, %s205
      %p209 = scmp.eq.s32.totalorder %s22, 0
      %p210 = por %p208, %p209
      %p211 = scmp.ne.s32.totalorder %s203, %s205
      %p212 = scmp.eq.s32.totalorder %s27, 1
      %p213 = por %p211, %p212
      %p214 = scmp.ne.s32.totalorder %s205, %s206
      %p215 = scmp.eq.s32.totalorder %s27, 0
      %p216 = por %p214, %p215
      %p217 = scmp.ne.s32.totalorder %s205, %s206
      %p218 = scmp.eq.s32.totalorder %s28, 1
      %p219 = por %p217, %p218
      %p221 = scmp.ne.s32.totalorder %s206, %s220
      %p222 = scmp.eq.s32.totalorder %s28, 0
      %p223 = por %p221, %p222
      %s225 = sadd.s32 %s224, 1
      %p228 = scmp.eq.s32.totalorder %s22, 1
      %p229 = scmp.ne.s32.totalorder %s224, %s226
      %p230 = scmp.eq.s32.totalorder %s22, 0
      %p231 = por %p229, %p230
      %p232 = scmp.ne.s32.totalorder %s224, %s226
      %p233 = scmp.eq.s32.totalorder %s27, 1
      %p234 = por %p232, %p233
      %p235 = scmp.ne.s32.totalorder %s226, %s227
      %p236 = scmp.eq.s32.totalorder %s27, 0
      %p237 = por %p235, %p236
      %p238 = scmp.ne.s32.totalorder %s226, %s227
      %p239 = scmp.eq.s32.totalorder %s28, 1
      %p240 = por %p238, %p239
      %p242 = scmp.ne.s32.totalorder %s227, %s241
      %p243 = scmp.eq.s32.totalorder %s28, 0
      %p244 = por %p242, %p243
      %s245 = ssub.s32 %s22, %s29
      %p246 = scmp.eq.s32.totalorder %s245, 0
      %s248 = sadd.s32 %s247, 1
      %s249 = scalar_select %p246, %s247, %s248
      %p252 = pneg %p246
      %p253 = scmp.eq.s32.totalorder %s22, 1
      %p254 = por %p252, %p253
      %p255 = scmp.ne.s32.totalorder %s247, %s250
      %p256 = scmp.eq.s32.totalorder %s22, 0
      %p257 = por %p255, %p256
      %p258 = scmp.ne.s32.totalorder %s247, %s250
      %p259 = scmp.eq.s32.totalorder %s27, 1
      %p260 = por %p258, %p259
      %p261 = scmp.ne.s32.totalorder %s250, %s251
      %p262 = scmp.eq.s32.totalorder %s27, 0
      %p263 = por %p261, %p262
      %p264 = scmp.ne.s32.totalorder %s250, %s251
      %p265 = scmp.eq.s32.totalorder %s28, 1
      %p266 = por %p264, %p265
      %p268 = scmp.ne.s32.totalorder %s251, %s267
      %p269 = scmp.eq.s32.totalorder %s28, 0
      %p270 = por %p268, %p269
      %p271 = scmp.le.s32.totalorder 1, %s22
      %p272 = scmp.lt.s32.totalorder %s22, 3
      %p273 = pnand %p271, %p272
      %p274 = pneg %p273
      // Predicated region
      $region9: #{tpu_custom_call.1} parent=5 // pred_check
        _
      $region10: #{tpu_custom_call.1} parent=5 // pred_check_branch
        %276 = sbr.rel (%p273) target = $region12
      $region11: #{tpu_custom_call.1} parent=5 // pred_region
        %s277 = ssub.s32 %s22, 1
        // Predicated region
        $region13: #{tpu_custom_call.1} parent=11 // pred_check
          %p278 = pneg %p69
        $region14: #{tpu_custom_call.1} parent=11 // pred_check_branch
          %280 = sbr.rel (%p278) target = $region16
        $region15: #{tpu_custom_call.1} parent=11 // pred_region
          _
        $region16: #{tpu_custom_call.1} parent=11 // pred_fallthru
          _
        // Predicated region
        $region17: #{tpu_custom_call.1} parent=11 // pred_check
          %p281 = pneg %p90
        $region18: #{tpu_custom_call.1} parent=11 // pred_check_branch
          %283 = sbr.rel (%p281) target = $region20
        $region19: #{tpu_custom_call.1} parent=11 // pred_region
          _
        $region20: #{tpu_custom_call.1} parent=11 // pred_fallthru
          _
        // Predicated region
        $region21: #{tpu_custom_call.1} parent=11 // pred_check
          %p284 = pneg %p111
        $region22: #{tpu_custom_call.1} parent=11 // pred_check_branch
          %286 = sbr.rel (%p284) target = $region24
        $region23: #{tpu_custom_call.1} parent=11 // pred_region
          _
        $region24: #{tpu_custom_call.1} parent=11 // pred_fallthru
          _
        // Predicated region
        $region25: #{tpu_custom_call.1} parent=11 // pred_check
          %p287 = pneg %p132
        $region26: #{tpu_custom_call.1} parent=11 // pred_check_branch
          %289 = sbr.rel (%p287) target = $region28
        $region27: #{tpu_custom_call.1} parent=11 // pred_region
          _
        $region28: #{tpu_custom_call.1} parent=11 // pred_fallthru
          _
        // Predicated region
        $region29: #{tpu_custom_call.1} parent=11 // pred_check
          %p290 = pneg %p153
        $region30: #{tpu_custom_call.1} parent=11 // pred_check_branch
          %292 = sbr.rel (%p290) target = $region32
        $region31: #{tpu_custom_call.1} parent=11 // pred_region
          _
        $region32: #{tpu_custom_call.1} parent=11 // pred_fallthru
          _
        // Predicated region
        $region33: #{tpu_custom_call.1} parent=11 // pred_check
          %p293 = pneg %p174
        $region34: #{tpu_custom_call.1} parent=11 // pred_check_branch
          %295 = sbr.rel (%p293) target = $region36
        $region35: #{tpu_custom_call.1} parent=11 // pred_region
          _
        $region36: #{tpu_custom_call.1} parent=11 // pred_fallthru
          _
        // Predicated region
        $region37: #{tpu_custom_call.1} parent=11 // pred_check
          %p296 = pneg %p195
        $region38: #{tpu_custom_call.1} parent=11 // pred_check_branch
          %298 = sbr.rel (%p296) target = $region40
        $region39: #{tpu_custom_call.1} parent=11 // pred_region
          _
        $region40: #{tpu_custom_call.1} parent=11 // pred_fallthru
          _
        // Predicated region
        $region41: #{tpu_custom_call.1} parent=11 // pred_check
          %p299 = pneg %p216
        $region42: #{tpu_custom_call.1} parent=11 // pred_check_branch
          %301 = sbr.rel (%p299) target = $region44
        $region43: #{tpu_custom_call.1} parent=11 // pred_region
          _
        $region44: #{tpu_custom_call.1} parent=11 // pred_fallthru
          _
        // Predicated region
        $region45: #{tpu_custom_call.1} parent=11 // pred_check
          %p302 = pneg %p237
        $region46: #{tpu_custom_call.1} parent=11 // pred_check_branch
          %304 = sbr.rel (%p302) target = $region48
        $region47: #{tpu_custom_call.1} parent=11 // pred_region
          _
        $region48: #{tpu_custom_call.1} parent=11 // pred_fallthru
          _
      $region12: #{tpu_custom_call.1} parent=5 // pred_fallthru
        _
      %p305 = scmp.lt.s32.totalorder %s22, 2
      // Predicated region
      $region49: #{tpu_custom_call.1} parent=5 // pred_check
        %p306 = pneg %p305
      $region50: #{tpu_custom_call.1} parent=5 // pred_check_branch
        %308 = sbr.rel (%p306) target = $region52
      $region51: #{tpu_custom_call.1} parent=5 // pred_region
        // Predicated region
        $region53: #{tpu_custom_call.1} parent=51 // pred_check
          %p309 = pneg %p42
        $region54: #{tpu_custom_call.1} parent=51 // pred_check_branch
          %311 = sbr.rel (%p309) target = $region56
        $region55: #{tpu_custom_call.1} parent=51 // pred_region
          %s312 = sand.u32 %s32, 1
          %s313 = scalar_lea.sflag [#allocation3], %s312
          %s314 = sand.u32 %s32, 1
          %s315 = smul.addr %s314, 256
          %s316 = scalar_lea.vmem [#allocation2], %s315
          %s318 = ssub.s32 4096, 4096
          %319 = vsyncadd %s313, %s318
          %s320 = smul.addr %s22, 32
          %s321 = smul.addr %s320, 128
          %s322 = scalar_lea.hbm %s0, %s321
          %s323 = sshll.u32 %s316, 4
          %s324 = int_to_ptr.vmem [resolvable:$true] %s323
          %329 = dma.hbm_to_vmem [thread:$0]  %s322, 4096, %s324, %s313, 128, 128, 8
        $region56: #{tpu_custom_call.1} parent=51 // pred_fallthru
          _
      $region52: #{tpu_custom_call.1} parent=5 // pred_fallthru
        _
      %p330 = scmp.le.s32.totalorder 1, %s22
      %p331 = scmp.lt.s32.totalorder %s22, 3
      %p332 = pnand %p330, %p331
      %p333 = pneg %p332
      // Predicated region
      $region57: #{tpu_custom_call.1} parent=5 // pred_check
        _
      $region58: #{tpu_custom_call.1} parent=5 // pred_check_branch
        %335 = sbr.rel (%p332) target = $region60
      $region59: #{tpu_custom_call.1} parent=5 // pred_region
        %s336 = ssub.s32 %s22, 1
        %s337 = sand.u32 %s35, 1
        %s338 = scalar_lea.sflag [#allocation3], %s337
        %s339 = sand.u32 %s35, 1
        %s340 = smul.addr %s339, 256
        %s341 = scalar_lea.vmem [#allocation2], %s340
        // Predicated region
        $region61: #{tpu_custom_call.1} parent=59 // pred_check
          %p342 = pneg %p48
        $region62: #{tpu_custom_call.1} parent=59 // pred_check_branch
          %344 = sbr.rel (%p342) target = $region64
        $region63: #{tpu_custom_call.1} parent=59 // pred_region
          %345 = dma.done %s338, 4096
        $region64: #{tpu_custom_call.1} parent=59 // pred_fallthru
          _
        %s346 = sand.u32 %s35, 1
        %s347 = scalar_lea.sflag [#allocation3], %s346
        %s348 = sand.u32 %s35, 1
        %s349 = smul.addr %s348, 256
        %s350 = scalar_lea.vmem [#allocation2], %s349
        %p351 = pneg %p48
        %p352 = pneg %p45
        %p353 = pneg %p69
        %p354 = pneg %p66
        %p355 = pneg %p90
        %p356 = pneg %p87
        %p357 = pneg %p111
        %p358 = pneg %p108
        %p359 = pneg %p132
        %p360 = pneg %p129
        %p361 = pneg %p153
        %p362 = pneg %p150
        %p363 = pneg %p174
        %p364 = pneg %p171
        %p365 = pneg %p195
        %p366 = pneg %p192
        %p367 = pneg %p216
        %p368 = pneg %p213
        %p369 = pneg %p237
        %p370 = pneg %p234
        %p371 = pneg %p263
        %p372 = pneg %p260
        %s373 = sand.u32 %s250, 1
        %s374 = scalar_lea.sflag [#allocation4], %s373
        %s375 = sand.u32 %s250, 1
        %s376 = smul.addr %s375, 256
        %s377 = scalar_lea.vmem [#allocation5], %s376
        %v379 = vld [vmem:[%s341] sm:$0xff]
        %v380 = vld [vmem:[%s341 + $0x8] sm:$0xff]
        %v381 = vld [vmem:[%s341 + $0x10] sm:$0xff]
        %v382 = vld [vmem:[%s341 + $0x18] sm:$0xff]
        %v383 = vld [vmem:[%s341 + $0x20] sm:$0xff]
        %v384 = vld [vmem:[%s341 + $0x28] sm:$0xff]
        %v385 = vld [vmem:[%s341 + $0x30] sm:$0xff]
        %v386 = vld [vmem:[%s341 + $0x38] sm:$0xff]
        %v387 = vld [vmem:[%s341 + $0x40] sm:$0xff]
        %v388 = vld [vmem:[%s341 + $0x48] sm:$0xff]
        %v389 = vld [vmem:[%s341 + $0x50] sm:$0xff]
        %v390 = vld [vmem:[%s341 + $0x58] sm:$0xff]
        %v391 = vld [vmem:[%s341 + $0x60] sm:$0xff]
        %v392 = vld [vmem:[%s341 + $0x68] sm:$0xff]
        %v393 = vld [vmem:[%s341 + $0x70] sm:$0xff]
        %v394 = vld [vmem:[%s341 + $0x78] sm:$0xff]
        %v395 = vld [vmem:[%s341 + $0x80] sm:$0xff]
        %v396 = vld [vmem:[%s341 + $0x88] sm:$0xff]
        %v397 = vld [vmem:[%s341 + $0x90] sm:$0xff]
        %v398 = vld [vmem:[%s341 + $0x98] sm:$0xff]
        %v399 = vld [vmem:[%s341 + $0xa0] sm:$0xff]
        %v400 = vld [vmem:[%s341 + $0xa8] sm:$0xff]
        %v401 = vld [vmem:[%s341 + $0xb0] sm:$0xff]
        %v402 = vld [vmem:[%s341 + $0xb8] sm:$0xff]
        %v403 = vld [vmem:[%s341 + $0xc0] sm:$0xff]
        %v404 = vld [vmem:[%s341 + $0xc8] sm:$0xff]
        %v405 = vld [vmem:[%s341 + $0xd0] sm:$0xff]
        %v406 = vld [vmem:[%s341 + $0xd8] sm:$0xff]
        %v407 = vld [vmem:[%s341 + $0xe0] sm:$0xff]
        %v408 = vld [vmem:[%s341 + $0xe8] sm:$0xff]
        %v409 = vld [vmem:[%s341 + $0xf0] sm:$0xff]
        %v410 = vld [vmem:[%s341 + $0xf8] sm:$0xff]
        %v411 = vpack.c.bf16 %v380, %v379
        %v412 = vpack.c.bf16 %v382, %v381
        %v413 = vpack.c.bf16 %v384, %v383
        %v414 = vpack.c.bf16 %v386, %v385
        %v415 = vpack.c.bf16 %v388, %v387
        %v416 = vpack.c.bf16 %v390, %v389
        %v417 = vpack.c.bf16 %v392, %v391
        %v418 = vpack.c.bf16 %v394, %v393
        %v419 = vpack.c.bf16 %v396, %v395
        %v420 = vpack.c.bf16 %v398, %v397
        %v421 = vpack.c.bf16 %v400, %v399
        %v422 = vpack.c.bf16 %v402, %v401
        %v423 = vpack.c.bf16 %v404, %v403
        %v424 = vpack.c.bf16 %v406, %v405
        %v425 = vpack.c.bf16 %v408, %v407
        %v426 = vpack.c.bf16 %v410, %v409
        %v427 = vld [vmem:[%s1] sm:$0xf]
        %v428 = vld [vmem:[%s1 + $0x4] sm:$0xf]
        %v431 = vunpack.c.l.b16 %v427
        %v432 = vunpack.c.l.b16 %v428
        %v433 = vpack.c.b16 %v432, %v431
        %vm435 = vcmask 130048
        %v437 = vsel %vm435, %v411, 0
        %v440 = vsel %vm435, %v412, 0
        %v443 = vsel %vm435, %v413, 0
        %v446 = vsel %vm435, %v414, 0
        %v449 = vsel %vm435, %v415, 0
        %v452 = vsel %vm435, %v416, 0
        %v455 = vsel %vm435, %v417, 0
        %v458 = vsel %vm435, %v418, 0
        %v461 = vsel %vm435, %v419, 0
        %v464 = vsel %vm435, %v420, 0
        %v467 = vsel %vm435, %v421, 0
        %v470 = vsel %vm435, %v422, 0
        %v473 = vsel %vm435, %v423, 0
        %v476 = vsel %vm435, %v424, 0
        %v479 = vsel %vm435, %v425, 0
        %v482 = vsel %vm435, %v426, 0
        %484 = vmatprep.subr.bf16.mxu0 0
        %485 = vmatpush1.bf16.msra.mxu0 %v433
        %486 = vmatprep.subr.bf16.mxu0 0
        %487 = vmatpush1.bf16.msra.mxu0 0
        %488 = vmatprep.subr.bf16.mxu0 0
        %489 = vmatpush1.bf16.msra.mxu0 0
        %490 = vmatprep.subr.bf16.mxu0 0
        %491 = vmatpush1.bf16.msra.mxu0 0
        %492 = vmatprep.subr.bf16.mxu0 0
        %493 = vmatpush1.bf16.msra.mxu0 0
        %494 = vmatprep.subr.bf16.mxu0 0
        %495 = vmatpush1.bf16.msra.mxu0 0
        %496 = vmatprep.subr.bf16.mxu0 0
        %497 = vmatpush1.bf16.msra.mxu0 0
        %498 = vmatprep.subr.bf16.mxu0 0
        %499 = vmatpush1.bf16.msra.mxu0 0
        %500 = vmatprep.subr.bf16.mxu0 0
        %501 = vmatpush1.bf16.msra.mxu0 0
        %502 = vmatprep.subr.bf16.mxu0 0
        %503 = vmatpush1.bf16.msra.mxu0 0
        %504 = vmatprep.subr.bf16.mxu0 0
        %505 = vmatpush1.bf16.msra.mxu0 0
        %506 = vmatprep.subr.bf16.mxu0 0
        %507 = vmatpush1.bf16.msra.mxu0 0
        %508 = vmatprep.subr.bf16.mxu0 0
        %509 = vmatpush1.bf16.msra.mxu0 0
        %510 = vmatprep.subr.bf16.mxu0 0
        %511 = vmatpush1.bf16.msra.mxu0 0
        %512 = vmatprep.subr.bf16.mxu0 0
        %513 = vmatpush1.bf16.msra.mxu0 0
        %514 = vmatprep.subr.bf16.mxu0 0
        %515 = vmatpush1.bf16.msra.mxu0 0
        %516 = vmatprep.mubr.bf16.mxu0 0
        %517 = vmatmul.mubr.bf16.gmra.mrb[0].mxu0 %v437
        %v518 = vpop.f32.mrb[0].mxu0
        %v519 = vadd.f32 0.0, %v518
        %v520 = vpop.f32.mrb[0].mxu0
        %v521 = vpop.f32.mrb[0].mxu0
        %v522 = vadd.f32 0.0, %v521
        %v523 = vpop.f32.mrb[0].mxu0
        %524 = vmatprep.mubr.bf16.mxu0 0
        %525 = vmatmul.mubr.bf16.gmra.mrb[0].mxu0 %v440
        %v526 = vpop.f32.mrb[0].mxu0
        %v527 = vadd.f32 0.0, %v526
        %v528 = vpop.f32.mrb[0].mxu0
        %v529 = vpop.f32.mrb[0].mxu0
        %v530 = vadd.f32 0.0, %v529
        %v531 = vpop.f32.mrb[0].mxu0
        %532 = vmatprep.mubr.bf16.mxu0 0
        %533 = vmatmul.mubr.bf16.gmra.mrb[0].mxu0 %v443
        %v534 = vpop.f32.mrb[0].mxu0
        %v535 = vadd.f32 0.0, %v534
        %v536 = vpop.f32.mrb[0].mxu0
        %v537 = vpop.f32.mrb[0].mxu0
        %v538 = vadd.f32 0.0, %v537
        %v539 = vpop.f32.mrb[0].mxu0
        %540 = vmatprep.mubr.bf16.mxu0 0
        %541 = vmatmul.mubr.bf16.gmra.mrb[0].mxu0 %v446
        %v542 = vpop.f32.mrb[0].mxu0
        %v543 = vadd.f32 0.0, %v542
        %v544 = vpop.f32.mrb[0].mxu0
        %v545 = vpop.f32.mrb[0].mxu0
        %v546 = vadd.f32 0.0, %v545
        %v547 = vpop.f32.mrb[0].mxu0
        %548 = vmatprep.mubr.bf16.mxu0 0
        %549 = vmatmul.mubr.bf16.gmra.mrb[0].mxu0 %v449
        %v550 = vpop.f32.mrb[0].mxu0
        %v551 = vadd.f32 0.0, %v550
        %v552 = vpop.f32.mrb[0].mxu0
        %v553 = vpop.f32.mrb[0].mxu0
        %v554 = vadd.f32 0.0, %v553
        %v555 = vpop.f32.mrb[0].mxu0
        %556 = vmatprep.mubr.bf16.mxu0 0
        %557 = vmatmul.mubr.bf16.gmra.mrb[0].mxu0 %v452
        %v558 = vpop.f32.mrb[0].mxu0
        %v559 = vadd.f32 0.0, %v558
        %v560 = vpop.f32.mrb[0].mxu0
        %v561 = vpop.f32.mrb[0].mxu0
        %v562 = vadd.f32 0.0, %v561
        %v563 = vpop.f32.mrb[0].mxu0
        %564 = vmatprep.mubr.bf16.mxu0 0
        %565 = vmatmul.mubr.bf16.gmra.mrb[0].mxu0 %v455
        %v566 = vpop.f32.mrb[0].mxu0
        %v567 = vadd.f32 0.0, %v566
        %v568 = vpop.f32.mrb[0].mxu0
        %v569 = vpop.f32.mrb[0].mxu0
        %v570 = vadd.f32 0.0, %v569
        %v571 = vpop.f32.mrb[0].mxu0
        %572 = vmatprep.mubr.bf16.mxu0 0
        %573 = vmatmul.mubr.bf16.gmra.mrb[0].mxu0 %v458
        %v574 = vpop.f32.mrb[0].mxu0
        %v575 = vadd.f32 0.0, %v574
        %v576 = vpop.f32.mrb[0].mxu0
        %v577 = vpop.f32.mrb[0].mxu0
        %v578 = vadd.f32 0.0, %v577
        %v579 = vpop.f32.mrb[0].mxu0
        %580 = vmatprep.mubr.bf16.mxu0 0
        %581 = vmatmul.mubr.bf16.gmra.mrb[0].mxu0 %v461
        %v582 = vpop.f32.mrb[0].mxu0
        %v583 = vadd.f32 0.0, %v582
        %v584 = vpop.f32.mrb[0].mxu0
        %v585 = vpop.f32.mrb[0].mxu0
        %v586 = vadd.f32 0.0, %v585
        %v587 = vpop.f32.mrb[0].mxu0
        %588 = vmatprep.mubr.bf16.mxu0 0
        %589 = vmatmul.mubr.bf16.gmra.mrb[0].mxu0 %v464
        %v590 = vpop.f32.mrb[0].mxu0
        %v591 = vadd.f32 0.0, %v590
        %v592 = vpop.f32.mrb[0].mxu0
        %v593 = vpop.f32.mrb[0].mxu0
        %v594 = vadd.f32 0.0, %v593
        %v595 = vpop.f32.mrb[0].mxu0
        %596 = vmatprep.mubr.bf16.mxu0 0
        %597 = vmatmul.mubr.bf16.gmra.mrb[0].mxu0 %v467
        %v598 = vpop.f32.mrb[0].mxu0
        %v599 = vadd.f32 0.0, %v598
        %v600 = vpop.f32.mrb[0].mxu0
        %v601 = vpop.f32.mrb[0].mxu0
        %v602 = vadd.f32 0.0, %v601
        %v603 = vpop.f32.mrb[0].mxu0
        %604 = vmatprep.mubr.bf16.mxu0 0
        %605 = vmatmul.mubr.bf16.gmra.mrb[0].mxu0 %v470
        %v606 = vpop.f32.mrb[0].mxu0
        %v607 = vadd.f32 0.0, %v606
        %v608 = vpop.f32.mrb[0].mxu0
        %v609 = vpop.f32.mrb[0].mxu0
        %v610 = vadd.f32 0.0, %v609
        %v611 = vpop.f32.mrb[0].mxu0
        %612 = vmatprep.mubr.bf16.mxu0 0
        %613 = vmatmul.mubr.bf16.gmra.mrb[0].mxu0 %v473
        %v614 = vpop.f32.mrb[0].mxu0
        %v615 = vadd.f32 0.0, %v614
        %v616 = vpop.f32.mrb[0].mxu0
        %v617 = vpop.f32.mrb[0].mxu0
        %v618 = vadd.f32 0.0, %v617
        %v619 = vpop.f32.mrb[0].mxu0
        %620 = vmatprep.mubr.bf16.mxu0 0
        %621 = vmatmul.mubr.bf16.gmra.mrb[0].mxu0 %v476
        %v622 = vpop.f32.mrb[0].mxu0
        %v623 = vadd.f32 0.0, %v622
        %v624 = vpop.f32.mrb[0].mxu0
        %v625 = vpop.f32.mrb[0].mxu0
        %v626 = vadd.f32 0.0, %v625
        %v627 = vpop.f32.mrb[0].mxu0
        %628 = vmatprep.mubr.bf16.mxu0 0
        %629 = vmatmul.mubr.bf16.gmra.mrb[0].mxu0 %v479
        %v630 = vpop.f32.mrb[0].mxu0
        %v631 = vadd.f32 0.0, %v630
        %v632 = vpop.f32.mrb[0].mxu0
        %v633 = vpop.f32.mrb[0].mxu0
        %v634 = vadd.f32 0.0, %v633
        %v635 = vpop.f32.mrb[0].mxu0
        %636 = vmatprep.mubr.bf16.mxu0 0
        %637 = vmatmul.mubr.bf16.gmra.mrb[0].mxu0 %v482
        %v638 = vpop.f32.mrb[0].mxu0
        %v639 = vadd.f32 0.0, %v638
        %v640 = vpop.f32.mrb[0].mxu0
        %v641 = vpop.f32.mrb[0].mxu0
        %v642 = vadd.f32 0.0, %v641
        %v643 = vpop.f32.mrb[0].mxu0
        %644 = vdwg.mxu0
        %v645 = vld [vmem:[%s4] sm:$0x1]
        %v647 = vlaneseq
        %v648 = vshrl.u32 %v647, 7
        %v649 = vsub.s32 0, %v648
        %v650 = vrot.slane %v645, %v649
        %v652 = vmul.f32 %v519, %v650
        %v653 = vmul.f32 %v522, %v650
        %v654 = vmul.f32 %v527, %v650
        %v655 = vmul.f32 %v530, %v650
        %v656 = vmul.f32 %v535, %v650
        %v657 = vmul.f32 %v538, %v650
        %v658 = vmul.f32 %v543, %v650
        %v659 = vmul.f32 %v546, %v650
        %v660 = vmul.f32 %v551, %v650
        %v661 = vmul.f32 %v554, %v650
        %v662 = vmul.f32 %v559, %v650
        %v663 = vmul.f32 %v562, %v650
        %v664 = vmul.f32 %v567, %v650
        %v665 = vmul.f32 %v570, %v650
        %v666 = vmul.f32 %v575, %v650
        %v667 = vmul.f32 %v578, %v650
        %v668 = vmul.f32 %v583, %v650
        %v669 = vmul.f32 %v586, %v650
        %v670 = vmul.f32 %v591, %v650
        %v671 = vmul.f32 %v594, %v650
        %v672 = vmul.f32 %v599, %v650
        %v673 = vmul.f32 %v602, %v650
        %v674 = vmul.f32 %v607, %v650
        %v675 = vmul.f32 %v610, %v650
        %v676 = vmul.f32 %v615, %v650
        %v677 = vmul.f32 %v618, %v650
        %v678 = vmul.f32 %v623, %v650
        %v679 = vmul.f32 %v626, %v650
        %v680 = vmul.f32 %v631, %v650
        %v681 = vmul.f32 %v634, %v650
        %v682 = vmul.f32 %v639, %v650
        %v683 = vmul.f32 %v642, %v650
        %v684 = vld [vmem:[%s5] sm:$0x1]
        %v686 = vlaneseq
        %v687 = vshrl.u32 %v686, 7
        %v688 = vsub.s32 0, %v687
        %v689 = vrot.slane %v684, %v688
        %v691 = vadd.f32 %v652, %v689
        %v692 = vadd.f32 %v653, %v689
        %v693 = vadd.f32 %v654, %v689
        %v694 = vadd.f32 %v655, %v689
        %v695 = vadd.f32 %v656, %v689
        %v696 = vadd.f32 %v657, %v689
        %v697 = vadd.f32 %v658, %v689
        %v698 = vadd.f32 %v659, %v689
        %v699 = vadd.f32 %v660, %v689
        %v700 = vadd.f32 %v661, %v689
        %v701 = vadd.f32 %v662, %v689
        %v702 = vadd.f32 %v663, %v689
        %v703 = vadd.f32 %v664, %v689
        %v704 = vadd.f32 %v665, %v689
        %v705 = vadd.f32 %v666, %v689
        %v706 = vadd.f32 %v667, %v689
        %v707 = vadd.f32 %v668, %v689
        %v708 = vadd.f32 %v669, %v689
        %v709 = vadd.f32 %v670, %v689
        %v710 = vadd.f32 %v671, %v689
        %v711 = vadd.f32 %v672, %v689
        %v712 = vadd.f32 %v673, %v689
        %v713 = vadd.f32 %v674, %v689
        %v714 = vadd.f32 %v675, %v689
        %v715 = vadd.f32 %v676, %v689
        %v716 = vadd.f32 %v677, %v689
        %v717 = vadd.f32 %v678, %v689
        %v718 = vadd.f32 %v679, %v689
        %v719 = vadd.f32 %v680, %v689
        %v720 = vadd.f32 %v681, %v689
        %v721 = vadd.f32 %v682, %v689
        %v722 = vadd.f32 %v683, %v689
        %v723 = vmax.f32 %v691, 0.0
        %v724 = vmax.f32 %v692, 0.0
        %v725 = vmax.f32 %v693, 0.0
        %v726 = vmax.f32 %v694, 0.0
        %v727 = vmax.f32 %v695, 0.0
        %v728 = vmax.f32 %v696, 0.0
        %v729 = vmax.f32 %v697, 0.0
        %v730 = vmax.f32 %v698, 0.0
        %v731 = vmax.f32 %v699, 0.0
        %v732 = vmax.f32 %v700, 0.0
        %v733 = vmax.f32 %v701, 0.0
        %v734 = vmax.f32 %v702, 0.0
        %v735 = vmax.f32 %v703, 0.0
        %v736 = vmax.f32 %v704, 0.0
        %v737 = vmax.f32 %v705, 0.0
        %v738 = vmax.f32 %v706, 0.0
        %v739 = vmax.f32 %v707, 0.0
        %v740 = vmax.f32 %v708, 0.0
        %v741 = vmax.f32 %v709, 0.0
        %v742 = vmax.f32 %v710, 0.0
        %v743 = vmax.f32 %v711, 0.0
        %v744 = vmax.f32 %v712, 0.0
        %v745 = vmax.f32 %v713, 0.0
        %v746 = vmax.f32 %v714, 0.0
        %v747 = vmax.f32 %v715, 0.0
        %v748 = vmax.f32 %v716, 0.0
        %v749 = vmax.f32 %v717, 0.0
        %v750 = vmax.f32 %v718, 0.0
        %v751 = vmax.f32 %v719, 0.0
        %v752 = vmax.f32 %v720, 0.0
        %v753 = vmax.f32 %v721, 0.0
        %v754 = vmax.f32 %v722, 0.0
        %v755 = vpack.c.bf16 %v724, %v723
        %v756 = vpack.c.bf16 %v726, %v725
        %v757 = vpack.c.bf16 %v728, %v727
        %v758 = vpack.c.bf16 %v730, %v729
        %v759 = vpack.c.bf16 %v732, %v731
        %v760 = vpack.c.bf16 %v734, %v733
        %v761 = vpack.c.bf16 %v736, %v735
        %v762 = vpack.c.bf16 %v738, %v737
        %v763 = vpack.c.bf16 %v740, %v739
        %v764 = vpack.c.bf16 %v742, %v741
        %v765 = vpack.c.bf16 %v744, %v743
        %v766 = vpack.c.bf16 %v746, %v745
        %v767 = vpack.c.bf16 %v748, %v747
        %v768 = vpack.c.bf16 %v750, %v749
        %v769 = vpack.c.bf16 %v752, %v751
        %v770 = vpack.c.bf16 %v754, %v753
        %787 = vrot.lane.b32.xlu0 %v755, 4
        %v788 = vpop.permute.xlu0 %787
        %789 = vrot.lane.b32.xlu0 %v756, 4
        %v790 = vpop.permute.xlu0 %789
        %791 = vrot.lane.b32.xlu0 %v757, 4
        %v792 = vpop.permute.xlu0 %791
        %793 = vrot.lane.b32.xlu0 %v758, 4
        %v794 = vpop.permute.xlu0 %793
        %795 = vrot.lane.b32.xlu0 %v759, 4
        %v796 = vpop.permute.xlu0 %795
        %797 = vrot.lane.b32.xlu0 %v760, 4
        %v798 = vpop.permute.xlu0 %797
        %799 = vrot.lane.b32.xlu0 %v761, 4
        %v800 = vpop.permute.xlu0 %799
        %801 = vrot.lane.b32.xlu0 %v762, 4
        %v802 = vpop.permute.xlu0 %801
        %803 = vrot.lane.b32.xlu0 %v763, 4
        %v804 = vpop.permute.xlu0 %803
        %805 = vrot.lane.b32.xlu0 %v764, 4
        %v806 = vpop.permute.xlu0 %805
        %807 = vrot.lane.b32.xlu0 %v765, 4
        %v808 = vpop.permute.xlu0 %807
        %809 = vrot.lane.b32.xlu0 %v766, 4
        %v810 = vpop.permute.xlu0 %809
        %811 = vrot.lane.b32.xlu0 %v767, 4
        %v812 = vpop.permute.xlu0 %811
        %813 = vrot.lane.b32.xlu0 %v768, 4
        %v814 = vpop.permute.xlu0 %813
        %815 = vrot.lane.b32.xlu0 %v769, 4
        %v816 = vpop.permute.xlu0 %815
        %817 = vrot.lane.b32.xlu0 %v770, 4
        %v818 = vpop.permute.xlu0 %817
        %820 = vrot.lane.b32.xlu0 %v756, 8
        %v821 = vpop.permute.xlu0 %820
        %822 = vrot.lane.b32.xlu0 %v757, 8
        %v823 = vpop.permute.xlu0 %822
        %824 = vrot.lane.b32.xlu0 %v758, 8
        %v825 = vpop.permute.xlu0 %824
        %826 = vrot.lane.b32.xlu0 %v759, 8
        %v827 = vpop.permute.xlu0 %826
        %828 = vrot.lane.b32.xlu0 %v760, 8
        %v829 = vpop.permute.xlu0 %828
        %830 = vrot.lane.b32.xlu0 %v761, 8
        %v831 = vpop.permute.xlu0 %830
        %832 = vrot.lane.b32.xlu0 %v762, 8
        %v833 = vpop.permute.xlu0 %832
        %834 = vrot.lane.b32.xlu0 %v763, 8
        %v835 = vpop.permute.xlu0 %834
        %836 = vrot.lane.b32.xlu0 %v764, 8
        %v837 = vpop.permute.xlu0 %836
        %838 = vrot.lane.b32.xlu0 %v765, 8
        %v839 = vpop.permute.xlu0 %838
        %840 = vrot.lane.b32.xlu0 %v766, 8
        %v841 = vpop.permute.xlu0 %840
        %842 = vrot.lane.b32.xlu0 %v767, 8
        %v843 = vpop.permute.xlu0 %842
        %844 = vrot.lane.b32.xlu0 %v768, 8
        %v845 = vpop.permute.xlu0 %844
        %846 = vrot.lane.b32.xlu0 %v769, 8
        %v847 = vpop.permute.xlu0 %846
        %848 = vrot.lane.b32.xlu0 %v770, 8
        %v849 = vpop.permute.xlu0 %848
        %850 = vrot.lane.b32.xlu0 0, 8
        %v851 = vpop.permute.xlu0 %850
        %vm852 = vcmask 31744
        %v855 = vsel %vm852, 0, %v788
        %v858 = vsel %vm852, %v755, %v790
        %v861 = vsel %vm852, %v756, %v792
        %v864 = vsel %vm852, %v757, %v794
        %v867 = vsel %vm852, %v758, %v796
        %v870 = vsel %vm852, %v759, %v798
        %v873 = vsel %vm852, %v760, %v800
        %v876 = vsel %vm852, %v761, %v802
        %v879 = vsel %vm852, %v762, %v804
        %v882 = vsel %vm852, %v763, %v806
        %v885 = vsel %vm852, %v764, %v808
        %v888 = vsel %vm852, %v765, %v810
        %v891 = vsel %vm852, %v766, %v812
        %v894 = vsel %vm852, %v767, %v814
        %v897 = vsel %vm852, %v768, %v816
        %v900 = vsel %vm852, %v769, %v818
        %vm901 = vcmask 64512
        %v903 = vsel %vm901, %v855, %v821
        %v905 = vsel %vm901, %v858, %v823
        %v907 = vsel %vm901, %v861, %v825
        %v909 = vsel %vm901, %v864, %v827
        %v911 = vsel %vm901, %v867, %v829
        %v913 = vsel %vm901, %v870, %v831
        %v915 = vsel %vm901, %v873, %v833
        %v917 = vsel %vm901, %v876, %v835
        %v919 = vsel %vm901, %v879, %v837
        %v921 = vsel %vm901, %v882, %v839
        %v923 = vsel %vm901, %v885, %v841
        %v925 = vsel %vm901, %v888, %v843
        %v927 = vsel %vm901, %v891, %v845
        %v929 = vsel %vm901, %v894, %v847
        %v931 = vsel %vm901, %v897, %v849
        %v933 = vsel %vm901, %v900, %v851
        %v934 = vshrl.u32 %v903, 16
        %v936 = vrot.slane %v934, 7
        %v937 = vshll.u32 %v903, 16
        %v939 = vor.u32 %v936, %v937
        %v940 = vshrl.u32 %v905, 16
        %v942 = vrot.slane %v940, 7
        %v943 = vshll.u32 %v905, 16
        %v945 = vor.u32 %v942, %v943
        %v946 = vshrl.u32 %v907, 16
        %v948 = vrot.slane %v946, 7
        %v949 = vshll.u32 %v907, 16
        %v951 = vor.u32 %v948, %v949
        %v952 = vshrl.u32 %v909, 16
        %v954 = vrot.slane %v952, 7
        %v955 = vshll.u32 %v909, 16
        %v957 = vor.u32 %v954, %v955
        %v958 = vshrl.u32 %v911, 16
        %v960 = vrot.slane %v958, 7
        %v961 = vshll.u32 %v911, 16
        %v963 = vor.u32 %v960, %v961
        %v964 = vshrl.u32 %v913, 16
        %v966 = vrot.slane %v964, 7
        %v967 = vshll.u32 %v913, 16
        %v969 = vor.u32 %v966, %v967
        %v970 = vshrl.u32 %v915, 16
        %v972 = vrot.slane %v970, 7
        %v973 = vshll.u32 %v915, 16
        %v975 = vor.u32 %v972, %v973
        %v976 = vshrl.u32 %v917, 16
        %v978 = vrot.slane %v976, 7
        %v979 = vshll.u32 %v917, 16
        %v981 = vor.u32 %v978, %v979
        %v982 = vshrl.u32 %v919, 16
        %v984 = vrot.slane %v982, 7
        %v985 = vshll.u32 %v919, 16
        %v987 = vor.u32 %v984, %v985
        %v988 = vshrl.u32 %v921, 16
        %v990 = vrot.slane %v988, 7
        %v991 = vshll.u32 %v921, 16
        %v993 = vor.u32 %v990, %v991
        %v994 = vshrl.u32 %v923, 16
        %v996 = vrot.slane %v994, 7
        %v997 = vshll.u32 %v923, 16
        %v999 = vor.u32 %v996, %v997
        %v1000 = vshrl.u32 %v925, 16
        %v1002 = vrot.slane %v1000, 7
        %v1003 = vshll.u32 %v925, 16
        %v1005 = vor.u32 %v1002, %v1003
        %v1006 = vshrl.u32 %v927, 16
        %v1008 = vrot.slane %v1006, 7
        %v1009 = vshll.u32 %v927, 16
        %v1011 = vor.u32 %v1008, %v1009
        %v1012 = vshrl.u32 %v929, 16
        %v1014 = vrot.slane %v1012, 7
        %v1015 = vshll.u32 %v929, 16
        %v1017 = vor.u32 %v1014, %v1015
        %v1018 = vshrl.u32 %v931, 16
        %v1020 = vrot.slane %v1018, 7
        %v1021 = vshll.u32 %v931, 16
        %v1023 = vor.u32 %v1020, %v1021
        %v1024 = vshrl.u32 %v933, 16
        %v1026 = vrot.slane %v1024, 7
        %v1027 = vshll.u32 %v933, 16
        %v1029 = vor.u32 %v1026, %v1027
        %vm1046 = vcmask 1040384
        %vm1047 = vsmask.f32 256
        %vm1048 = vmand %vm1046, %vm1047
        %v1049 = vsel %vm1048, 0, %v939
        %v1050 = vsel %vm1048, 0, %v945
        %v1051 = vsel %vm1048, 0, %v951
        %v1052 = vsel %vm1048, 0, %v957
        %v1053 = vsel %vm1048, 0, %v963
        %v1054 = vsel %vm1048, 0, %v969
        %v1055 = vsel %vm1048, 0, %v975
        %v1056 = vsel %vm1048, 0, %v981
        %v1057 = vsel %vm1048, 0, %v987
        %v1058 = vsel %vm1048, 0, %v993
        %v1059 = vsel %vm1048, 0, %v999
        %v1060 = vsel %vm1048, 0, %v1005
        %v1061 = vsel %vm1048, 0, %v1011
        %v1062 = vsel %vm1048, 0, %v1017
        %v1063 = vsel %vm1048, 0, %v1023
        %v1064 = vsel %vm1048, 0, %v1029
        %v1065 = vrot.slane %v937, 1
        %v1066 = vor.u32 %v934, %v1065
        %v1067 = vrot.slane %v943, 1
        %v1068 = vor.u32 %v940, %v1067
        %v1069 = vrot.slane %v949, 1
        %v1070 = vor.u32 %v946, %v1069
        %v1071 = vrot.slane %v955, 1
        %v1072 = vor.u32 %v952, %v1071
        %v1073 = vrot.slane %v961, 1
        %v1074 = vor.u32 %v958, %v1073
        %v1075 = vrot.slane %v967, 1
        %v1076 = vor.u32 %v964, %v1075
        %v1077 = vrot.slane %v973, 1
        %v1078 = vor.u32 %v970, %v1077
        %v1079 = vrot.slane %v979, 1
        %v1080 = vor.u32 %v976, %v1079
        %v1081 = vrot.slane %v985, 1
        %v1082 = vor.u32 %v982, %v1081
        %v1083 = vrot.slane %v991, 1
        %v1084 = vor.u32 %v988, %v1083
        %v1085 = vrot.slane %v997, 1
        %v1086 = vor.u32 %v994, %v1085
        %v1087 = vrot.slane %v1003, 1
        %v1088 = vor.u32 %v1000, %v1087
        %v1089 = vrot.slane %v1009, 1
        %v1090 = vor.u32 %v1006, %v1089
        %v1091 = vrot.slane %v1015, 1
        %v1092 = vor.u32 %v1012, %v1091
        %v1093 = vrot.slane %v1021, 1
        %v1094 = vor.u32 %v1018, %v1093
        %v1095 = vrot.slane %v1027, 1
        %v1096 = vor.u32 %v1024, %v1095
        %vm1113 = vcmask 1047552
        %vm1114 = vsmask.f32 7424
        %vm1115 = vmand %vm1113, %vm1114
        %v1116 = vsel %vm1115, %v1066, 0
        %v1117 = vsel %vm1115, %v1068, 0
        %v1118 = vsel %vm1115, %v1070, 0
        %v1119 = vsel %vm1115, %v1072, 0
        %v1120 = vsel %vm1115, %v1074, 0
        %v1121 = vsel %vm1115, %v1076, 0
        %v1122 = vsel %vm1115, %v1078, 0
        %v1123 = vsel %vm1115, %v1080, 0
        %v1124 = vsel %vm1115, %v1082, 0
        %v1125 = vsel %vm1115, %v1084, 0
        %v1126 = vsel %vm1115, %v1086, 0
        %v1127 = vsel %vm1115, %v1088, 0
        %v1128 = vsel %vm1115, %v1090, 0
        %v1129 = vsel %vm1115, %v1092, 0
        %v1130 = vsel %vm1115, %v1094, 0
        %v1131 = vsel %vm1115, %v1096, 0
        %s1132 = scalar_lea.vmem %s2, 8
        %v1133 = vld [vmem:[%s1132] sm:$0xf]
        %v1134 = vld [vmem:[%s1132 + $0x4] sm:$0x3]
        %v1135 = vld [vmem:[%s2] sm:$0xf]
        %v1136 = vld [vmem:[%s2 + $0x4] sm:$0x3]
        %v1139 = vunpack.c.l.b16 %v1135
        %v1140 = vunpack.c.l.b16 %v1136
        %v1141 = vpack.c.b16 %v1140, %v1139
        %vm1142 = vcmask 97280
        %v1144 = vsel %vm1142, %v1049, 0
        %v1147 = vsel %vm1142, %v1050, 0
        %v1150 = vsel %vm1142, %v1051, 0
        %v1153 = vsel %vm1142, %v1052, 0
        %v1156 = vsel %vm1142, %v1053, 0
        %v1159 = vsel %vm1142, %v1054, 0
        %v1162 = vsel %vm1142, %v1055, 0
        %v1165 = vsel %vm1142, %v1056, 0
        %v1168 = vsel %vm1142, %v1057, 0
        %v1171 = vsel %vm1142, %v1058, 0
        %v1174 = vsel %vm1142, %v1059, 0
        %v1177 = vsel %vm1142, %v1060, 0
        %v1180 = vsel %vm1142, %v1061, 0
        %v1183 = vsel %vm1142, %v1062, 0
        %v1186 = vsel %vm1142, %v1063, 0
        %v1189 = vsel %vm1142, %v1064, 0
        %vm1191 = vcmask 1045504
        %v1193 = vsel %vm1191, %v1141, 0
        %1195 = vmatprep.subr.bf16.mxu0 0
        %1196 = vmatpush1.bf16.msra.mxu0 %v1193
        %1197 = vmatprep.subr.bf16.mxu0 0
        %1198 = vmatpush1.bf16.msra.mxu0 0
        %1199 = vmatprep.subr.bf16.mxu0 0
        %1200 = vmatpush1.bf16.msra.mxu0 0
        %1201 = vmatprep.subr.bf16.mxu0 0
        %1202 = vmatpush1.bf16.msra.mxu0 0
        %1203 = vmatprep.subr.bf16.mxu0 0
        %1204 = vmatpush1.bf16.msra.mxu0 0
        %1205 = vmatprep.subr.bf16.mxu0 0
        %1206 = vmatpush1.bf16.msra.mxu0 0
        %1207 = vmatprep.subr.bf16.mxu0 0
        %1208 = vmatpush1.bf16.msra.mxu0 0
        %1209 = vmatprep.subr.bf16.mxu0 0
        %1210 = vmatpush1.bf16.msra.mxu0 0
        %1211 = vmatprep.subr.bf16.mxu0 0
        %1212 = vmatpush1.bf16.msra.mxu0 0
        %1213 = vmatprep.subr.bf16.mxu0 0
        %1214 = vmatpush1.bf16.msra.mxu0 0
        %1215 = vmatprep.subr.bf16.mxu0 0
        %1216 = vmatpush1.bf16.msra.mxu0 0
        %1217 = vmatprep.subr.bf16.mxu0 0
        %1218 = vmatpush1.bf16.msra.mxu0 0
        %1219 = vmatprep.subr.bf16.mxu0 0
        %1220 = vmatpush1.bf16.msra.mxu0 0
        %1221 = vmatprep.subr.bf16.mxu0 0
        %1222 = vmatpush1.bf16.msra.mxu0 0
        %1223 = vmatprep.subr.bf16.mxu0 0
        %1224 = vmatpush1.bf16.msra.mxu0 0
        %1225 = vmatprep.subr.bf16.mxu0 0
        %1226 = vmatpush1.bf16.msra.mxu0 0
        %1227 = vmatprep.mubr.bf16.mxu0 0
        %1228 = vmatmul.mubr.bf16.gmra.mrb[0].mxu0 %v1144
        %v1229 = vpop.f32.mrb[0].mxu0
        %v1230 = vadd.f32 0.0, %v1229
        %v1231 = vpop.f32.mrb[0].mxu0
        %v1232 = vpop.f32.mrb[0].mxu0
        %v1233 = vadd.f32 0.0, %v1232
        %v1234 = vpop.f32.mrb[0].mxu0
        %1235 = vmatprep.mubr.bf16.mxu0 0
        %1236 = vmatmul.mubr.bf16.gmra.mrb[0].mxu0 %v1147
        %v1237 = vpop.f32.mrb[0].mxu0
        %v1238 = vadd.f32 0.0, %v1237
        %v1239 = vpop.f32.mrb[0].mxu0
        %v1240 = vpop.f32.mrb[0].mxu0
        %v1241 = vadd.f32 0.0, %v1240
        %v1242 = vpop.f32.mrb[0].mxu0
        %1243 = vmatprep.mubr.bf16.mxu0 0
        %1244 = vmatmul.mubr.bf16.gmra.mrb[0].mxu0 %v1150
        %v1245 = vpop.f32.mrb[0].mxu0
        %v1246 = vadd.f32 0.0, %v1245
        %v1247 = vpop.f32.mrb[0].mxu0
        %v1248 = vpop.f32.mrb[0].mxu0
        %v1249 = vadd.f32 0.0, %v1248
        %v1250 = vpop.f32.mrb[0].mxu0
        %1251 = vmatprep.mubr.bf16.mxu0 0
        %1252 = vmatmul.mubr.bf16.gmra.mrb[0].mxu0 %v1153
        %v1253 = vpop.f32.mrb[0].mxu0
        %v1254 = vadd.f32 0.0, %v1253
        %v1255 = vpop.f32.mrb[0].mxu0
        %v1256 = vpop.f32.mrb[0].mxu0
        %v1257 = vadd.f32 0.0, %v1256
        %v1258 = vpop.f32.mrb[0].mxu0
        %1259 = vmatprep.mubr.bf16.mxu0 0
        %1260 = vmatmul.mubr.bf16.gmra.mrb[0].mxu0 %v1156
        %v1261 = vpop.f32.mrb[0].mxu0
        %v1262 = vadd.f32 0.0, %v1261
        %v1263 = vpop.f32.mrb[0].mxu0
        %v1264 = vpop.f32.mrb[0].mxu0
        %v1265 = vadd.f32 0.0, %v1264
        %v1266 = vpop.f32.mrb[0].mxu0
        %1267 = vmatprep.mubr.bf16.mxu0 0
        %1268 = vmatmul.mubr.bf16.gmra.mrb[0].mxu0 %v1159
        %v1269 = vpop.f32.mrb[0].mxu0
        %v1270 = vadd.f32 0.0, %v1269
        %v1271 = vpop.f32.mrb[0].mxu0
        %v1272 = vpop.f32.mrb[0].mxu0
        %v1273 = vadd.f32 0.0, %v1272
        %v1274 = vpop.f32.mrb[0].mxu0
        %1275 = vmatprep.mubr.bf16.mxu0 0
        %1276 = vmatmul.mubr.bf16.gmra.mrb[0].mxu0 %v1162
        %v1277 = vpop.f32.mrb[0].mxu0
        %v1278 = vadd.f32 0.0, %v1277
        %v1279 = vpop.f32.mrb[0].mxu0
        %v1280 = vpop.f32.mrb[0].mxu0
        %v1281 = vadd.f32 0.0, %v1280
        %v1282 = vpop.f32.mrb[0].mxu0
        %1283 = vmatprep.mubr.bf16.mxu0 0
        %1284 = vmatmul.mubr.bf16.gmra.mrb[0].mxu0 %v1165
        %v1285 = vpop.f32.mrb[0].mxu0
        %v1286 = vadd.f32 0.0, %v1285
        %v1287 = vpop.f32.mrb[0].mxu0
        %v1288 = vpop.f32.mrb[0].mxu0
        %v1289 = vadd.f32 0.0, %v1288
        %v1290 = vpop.f32.mrb[0].mxu0
        %1291 = vmatprep.mubr.bf16.mxu0 0
        %1292 = vmatmul.mubr.bf16.gmra.mrb[0].mxu0 %v1168
        %v1293 = vpop.f32.mrb[0].mxu0
        %v1294 = vadd.f32 0.0, %v1293
        %v1295 = vpop.f32.mrb[0].mxu0
        %v1296 = vpop.f32.mrb[0].mxu0
        %v1297 = vadd.f32 0.0, %v1296
        %v1298 = vpop.f32.mrb[0].mxu0
        %1299 = vmatprep.mubr.bf16.mxu0 0
        %1300 = vmatmul.mubr.bf16.gmra.mrb[0].mxu0 %v1171
        %v1301 = vpop.f32.mrb[0].mxu0
        %v1302 = vadd.f32 0.0, %v1301
        %v1303 = vpop.f32.mrb[0].mxu0
        %v1304 = vpop.f32.mrb[0].mxu0
        %v1305 = vadd.f32 0.0, %v1304
        %v1306 = vpop.f32.mrb[0].mxu0
        %1307 = vmatprep.mubr.bf16.mxu0 0
        %1308 = vmatmul.mubr.bf16.gmra.mrb[0].mxu0 %v1174
        %v1309 = vpop.f32.mrb[0].mxu0
        %v1310 = vadd.f32 0.0, %v1309
        %v1311 = vpop.f32.mrb[0].mxu0
        %v1312 = vpop.f32.mrb[0].mxu0
        %v1313 = vadd.f32 0.0, %v1312
        %v1314 = vpop.f32.mrb[0].mxu0
        %1315 = vmatprep.mubr.bf16.mxu0 0
        %1316 = vmatmul.mubr.bf16.gmra.mrb[0].mxu0 %v1177
        %v1317 = vpop.f32.mrb[0].mxu0
        %v1318 = vadd.f32 0.0, %v1317
        %v1319 = vpop.f32.mrb[0].mxu0
        %v1320 = vpop.f32.mrb[0].mxu0
        %v1321 = vadd.f32 0.0, %v1320
        %v1322 = vpop.f32.mrb[0].mxu0
        %1323 = vmatprep.mubr.bf16.mxu0 0
        %1324 = vmatmul.mubr.bf16.gmra.mrb[0].mxu0 %v1180
        %v1325 = vpop.f32.mrb[0].mxu0
        %v1326 = vadd.f32 0.0, %v1325
        %v1327 = vpop.f32.mrb[0].mxu0
        %v1328 = vpop.f32.mrb[0].mxu0
        %v1329 = vadd.f32 0.0, %v1328
        %v1330 = vpop.f32.mrb[0].mxu0
        %1331 = vmatprep.mubr.bf16.mxu0 0
        %1332 = vmatmul.mubr.bf16.gmra.mrb[0].mxu0 %v1183
        %v1333 = vpop.f32.mrb[0].mxu0
        %v1334 = vadd.f32 0.0, %v1333
        %v1335 = vpop.f32.mrb[0].mxu0
        %v1336 = vpop.f32.mrb[0].mxu0
        %v1337 = vadd.f32 0.0, %v1336
        %v1338 = vpop.f32.mrb[0].mxu0
        %1339 = vmatprep.mubr.bf16.mxu0 0
        %1340 = vmatmul.mubr.bf16.gmra.mrb[0].mxu0 %v1186
        %v1341 = vpop.f32.mrb[0].mxu0
        %v1342 = vadd.f32 0.0, %v1341
        %v1343 = vpop.f32.mrb[0].mxu0
        %v1344 = vpop.f32.mrb[0].mxu0
        %v1345 = vadd.f32 0.0, %v1344
        %v1346 = vpop.f32.mrb[0].mxu0
        %1347 = vmatprep.mubr.bf16.mxu0 0
        %1348 = vmatmul.mubr.bf16.gmra.mrb[0].mxu0 %v1189
        %v1349 = vpop.f32.mrb[0].mxu0
        %v1350 = vadd.f32 0.0, %v1349
        %v1351 = vpop.f32.mrb[0].mxu0
        %v1352 = vpop.f32.mrb[0].mxu0
        %v1353 = vadd.f32 0.0, %v1352
        %v1354 = vpop.f32.mrb[0].mxu0
        %1355 = vdwg.mxu0
        %v1358 = vunpack.c.l.b16 %v1133
        %v1359 = vunpack.c.l.b16 %v1134
        %v1360 = vpack.c.b16 %v1359, %v1358
        %v1361 = vsel %vm1142, %v903, 0
        %v1363 = vsel %vm1142, %v905, 0
        %v1365 = vsel %vm1142, %v907, 0
        %v1367 = vsel %vm1142, %v909, 0
        %v1369 = vsel %vm1142, %v911, 0
        %v1371 = vsel %vm1142, %v913, 0
        %v1373 = vsel %vm1142, %v915, 0
        %v1375 = vsel %vm1142, %v917, 0
        %v1377 = vsel %vm1142, %v919, 0
        %v1379 = vsel %vm1142, %v921, 0
        %v1381 = vsel %vm1142, %v923, 0
        %v1383 = vsel %vm1142, %v925, 0
        %v1385 = vsel %vm1142, %v927, 0
        %v1387 = vsel %vm1142, %v929, 0
        %v1389 = vsel %vm1142, %v931, 0
        %v1391 = vsel %vm1142, %v933, 0
        %v1394 = vsel %vm1191, %v1360, 0
        %1396 = vmatprep.subr.bf16.mxu0 0
        %1397 = vmatpush1.bf16.msra.mxu0 %v1394
        %1398 = vmatprep.subr.bf16.mxu0 0
        %1399 = vmatpush1.bf16.msra.mxu0 0
        %1400 = vmatprep.subr.bf16.mxu0 0
        %1401 = vmatpush1.bf16.msra.mxu0 0
        %1402 = vmatprep.subr.bf16.mxu0 0
        %1403 = vmatpush1.bf16.msra.mxu0 0
        %1404 = vmatprep.subr.bf16.mxu0 0
        %1405 = vmatpush1.bf16.msra.mxu0 0
        %1406 = vmatprep.subr.bf16.mxu0 0
        %1407 = vmatpush1.bf16.msra.mxu0 0
        %1408 = vmatprep.subr.bf16.mxu0 0
        %1409 = vmatpush1.bf16.msra.mxu0 0
        %1410 = vmatprep.subr.bf16.mxu0 0
        %1411 = vmatpush1.bf16.msra.mxu0 0
        %1412 = vmatprep.subr.bf16.mxu0 0
        %1413 = vmatpush1.bf16.msra.mxu0 0
        %1414 = vmatprep.subr.bf16.mxu0 0
        %1415 = vmatpush1.bf16.msra.mxu0 0
        %1416 = vmatprep.subr.bf16.mxu0 0
        %1417 = vmatpush1.bf16.msra.mxu0 0
        %1418 = vmatprep.subr.bf16.mxu0 0
        %1419 = vmatpush1.bf16.msra.mxu0 0
        %1420 = vmatprep.subr.bf16.mxu0 0
        %1421 = vmatpush1.bf16.msra.mxu0 0
        %1422 = vmatprep.subr.bf16.mxu0 0
        %1423 = vmatpush1.bf16.msra.mxu0 0
        %1424 = vmatprep.subr.bf16.mxu0 0
        %1425 = vmatpush1.bf16.msra.mxu0 0
        %1426 = vmatprep.subr.bf16.mxu0 0
        %1427 = vmatpush1.bf16.msra.mxu0 0
        %1428 = vmatprep.mubr.bf16.mxu0 0
        %1429 = vmatmul.mubr.bf16.gmra.mrb[0].mxu0 %v1361
        %v1430 = vpop.f32.mrb[0].mxu0
        %v1431 = vadd.f32 %v1230, %v1430
        %v1432 = vpop.f32.mrb[0].mxu0
        %v1433 = vpop.f32.mrb[0].mxu0
        %v1434 = vadd.f32 %v1233, %v1433
        %v1435 = vpop.f32.mrb[0].mxu0
        %1436 = vmatprep.mubr.bf16.mxu0 0
        %1437 = vmatmul.mubr.bf16.gmra.mrb[0].mxu0 %v1363
        %v1438 = vpop.f32.mrb[0].mxu0
        %v1439 = vadd.f32 %v1238, %v1438
        %v1440 = vpop.f32.mrb[0].mxu0
        %v1441 = vpop.f32.mrb[0].mxu0
        %v1442 = vadd.f32 %v1241, %v1441
        %v1443 = vpop.f32.mrb[0].mxu0
        %1444 = vmatprep.mubr.bf16.mxu0 0
        %1445 = vmatmul.mubr.bf16.gmra.mrb[0].mxu0 %v1365
        %v1446 = vpop.f32.mrb[0].mxu0
        %v1447 = vadd.f32 %v1246, %v1446
        %v1448 = vpop.f32.mrb[0].mxu0
        %v1449 = vpop.f32.mrb[0].mxu0
        %v1450 = vadd.f32 %v1249, %v1449
        %v1451 = vpop.f32.mrb[0].mxu0
        %1452 = vmatprep.mubr.bf16.mxu0 0
        %1453 = vmatmul.mubr.bf16.gmra.mrb[0].mxu0 %v1367
        %v1454 = vpop.f32.mrb[0].mxu0
        %v1455 = vadd.f32 %v1254, %v1454
        %v1456 = vpop.f32.mrb[0].mxu0
        %v1457 = vpop.f32.mrb[0].mxu0
        %v1458 = vadd.f32 %v1257, %v1457
        %v1459 = vpop.f32.mrb[0].mxu0
        %1460 = vmatprep.mubr.bf16.mxu0 0
        %1461 = vmatmul.mubr.bf16.gmra.mrb[0].mxu0 %v1369
        %v1462 = vpop.f32.mrb[0].mxu0
        %v1463 = vadd.f32 %v1262, %v1462
        %v1464 = vpop.f32.mrb[0].mxu0
        %v1465 = vpop.f32.mrb[0].mxu0
        %v1466 = vadd.f32 %v1265, %v1465
        %v1467 = vpop.f32.mrb[0].mxu0
        %1468 = vmatprep.mubr.bf16.mxu0 0
        %1469 = vmatmul.mubr.bf16.gmra.mrb[0].mxu0 %v1371
        %v1470 = vpop.f32.mrb[0].mxu0
        %v1471 = vadd.f32 %v1270, %v1470
        %v1472 = vpop.f32.mrb[0].mxu0
        %v1473 = vpop.f32.mrb[0].mxu0
        %v1474 = vadd.f32 %v1273, %v1473
        %v1475 = vpop.f32.mrb[0].mxu0
        %1476 = vmatprep.mubr.bf16.mxu0 0
        %1477 = vmatmul.mubr.bf16.gmra.mrb[0].mxu0 %v1373
        %v1478 = vpop.f32.mrb[0].mxu0
        %v1479 = vadd.f32 %v1278, %v1478
        %v1480 = vpop.f32.mrb[0].mxu0
        %v1481 = vpop.f32.mrb[0].mxu0
        %v1482 = vadd.f32 %v1281, %v1481
        %v1483 = vpop.f32.mrb[0].mxu0
        %1484 = vmatprep.mubr.bf16.mxu0 0
        %1485 = vmatmul.mubr.bf16.gmra.mrb[0].mxu0 %v1375
        %v1486 = vpop.f32.mrb[0].mxu0
        %v1487 = vadd.f32 %v1286, %v1486
        %v1488 = vpop.f32.mrb[0].mxu0
        %v1489 = vpop.f32.mrb[0].mxu0
        %v1490 = vadd.f32 %v1289, %v1489
        %v1491 = vpop.f32.mrb[0].mxu0
        %1492 = vmatprep.mubr.bf16.mxu0 0
        %1493 = vmatmul.mubr.bf16.gmra.mrb[0].mxu0 %v1377
        %v1494 = vpop.f32.mrb[0].mxu0
        %v1495 = vadd.f32 %v1294, %v1494
        %v1496 = vpop.f32.mrb[0].mxu0
        %v1497 = vpop.f32.mrb[0].mxu0
        %v1498 = vadd.f32 %v1297, %v1497
        %v1499 = vpop.f32.mrb[0].mxu0
        %1500 = vmatprep.mubr.bf16.mxu0 0
        %1501 = vmatmul.mubr.bf16.gmra.mrb[0].mxu0 %v1379
        %v1502 = vpop.f32.mrb[0].mxu0
        %v1503 = vadd.f32 %v1302, %v1502
        %v1504 = vpop.f32.mrb[0].mxu0
        %v1505 = vpop.f32.mrb[0].mxu0
        %v1506 = vadd.f32 %v1305, %v1505
        %v1507 = vpop.f32.mrb[0].mxu0
        %1508 = vmatprep.mubr.bf16.mxu0 0
        %1509 = vmatmul.mubr.bf16.gmra.mrb[0].mxu0 %v1381
        %v1510 = vpop.f32.mrb[0].mxu0
        %v1511 = vadd.f32 %v1310, %v1510
        %v1512 = vpop.f32.mrb[0].mxu0
        %v1513 = vpop.f32.mrb[0].mxu0
        %v1514 = vadd.f32 %v1313, %v1513
        %v1515 = vpop.f32.mrb[0].mxu0
        %1516 = vmatprep.mubr.bf16.mxu0 0
        %1517 = vmatmul.mubr.bf16.gmra.mrb[0].mxu0 %v1383
        %v1518 = vpop.f32.mrb[0].mxu0
        %v1519 = vadd.f32 %v1318, %v1518
        %v1520 = vpop.f32.mrb[0].mxu0
        %v1521 = vpop.f32.mrb[0].mxu0
        %v1522 = vadd.f32 %v1321, %v1521
        %v1523 = vpop.f32.mrb[0].mxu0
        %1524 = vmatprep.mubr.bf16.mxu0 0
        %1525 = vmatmul.mubr.bf16.gmra.mrb[0].mxu0 %v1385
        %v1526 = vpop.f32.mrb[0].mxu0
        %v1527 = vadd.f32 %v1326, %v1526
        %v1528 = vpop.f32.mrb[0].mxu0
        %v1529 = vpop.f32.mrb[0].mxu0
        %v1530 = vadd.f32 %v1329, %v1529
        %v1531 = vpop.f32.mrb[0].mxu0
        %1532 = vmatprep.mubr.bf16.mxu0 0
        %1533 = vmatmul.mubr.bf16.gmra.mrb[0].mxu0 %v1387
        %v1534 = vpop.f32.mrb[0].mxu0
        %v1535 = vadd.f32 %v1334, %v1534
        %v1536 = vpop.f32.mrb[0].mxu0
        %v1537 = vpop.f32.mrb[0].mxu0
        %v1538 = vadd.f32 %v1337, %v1537
        %v1539 = vpop.f32.mrb[0].mxu0
        %1540 = vmatprep.mubr.bf16.mxu0 0
        %1541 = vmatmul.mubr.bf16.gmra.mrb[0].mxu0 %v1389
        %v1542 = vpop.f32.mrb[0].mxu0
        %v1543 = vadd.f32 %v1342, %v1542
        %v1544 = vpop.f32.mrb[0].mxu0
        %v1545 = vpop.f32.mrb[0].mxu0
        %v1546 = vadd.f32 %v1345, %v1545
        %v1547 = vpop.f32.mrb[0].mxu0
        %1548 = vmatprep.mubr.bf16.mxu0 0
        %1549 = vmatmul.mubr.bf16.gmra.mrb[0].mxu0 %v1391
        %v1550 = vpop.f32.mrb[0].mxu0
        %v1551 = vadd.f32 %v1350, %v1550
        %v1552 = vpop.f32.mrb[0].mxu0
        %v1553 = vpop.f32.mrb[0].mxu0
        %v1554 = vadd.f32 %v1353, %v1553
        %v1555 = vpop.f32.mrb[0].mxu0
        %1556 = vdwg.mxu0
        %s1557 = scalar_lea.vmem %s2, 16
        %v1558 = vld [vmem:[%s1557] sm:$0xf]
        %v1559 = vld [vmem:[%s1557 + $0x4] sm:$0x3]
        %v1562 = vunpack.c.l.b16 %v1558
        %v1563 = vunpack.c.l.b16 %v1559
        %v1564 = vpack.c.b16 %v1563, %v1562
        %v1566 = vsel %vm1142, %v1116, 0
        %v1569 = vsel %vm1142, %v1117, 0
        %v1572 = vsel %vm1142, %v1118, 0
        %v1575 = vsel %vm1142, %v1119, 0
        %v1578 = vsel %vm1142, %v1120, 0
        %v1581 = vsel %vm1142, %v1121, 0
        %v1584 = vsel %vm1142, %v1122, 0
        %v1587 = vsel %vm1142, %v1123, 0
        %v1590 = vsel %vm1142, %v1124, 0
        %v1593 = vsel %vm1142, %v1125, 0
        %v1596 = vsel %vm1142, %v1126, 0
        %v1599 = vsel %vm1142, %v1127, 0
        %v1602 = vsel %vm1142, %v1128, 0
        %v1605 = vsel %vm1142, %v1129, 0
        %v1608 = vsel %vm1142, %v1130, 0
        %v1611 = vsel %vm1142, %v1131, 0
        %v1614 = vsel %vm1191, %v1564, 0
        %1616 = vmatprep.subr.bf16.mxu0 0
        %1617 = vmatpush1.bf16.msra.mxu0 %v1614
        %1618 = vmatprep.subr.bf16.mxu0 0
        %1619 = vmatpush1.bf16.msra.mxu0 0
        %1620 = vmatprep.subr.bf16.mxu0 0
        %1621 = vmatpush1.bf16.msra.mxu0 0
        %1622 = vmatprep.subr.bf16.mxu0 0
        %1623 = vmatpush1.bf16.msra.mxu0 0
        %1624 = vmatprep.subr.bf16.mxu0 0
        %1625 = vmatpush1.bf16.msra.mxu0 0
        %1626 = vmatprep.subr.bf16.mxu0 0
        %1627 = vmatpush1.bf16.msra.mxu0 0
        %1628 = vmatprep.subr.bf16.mxu0 0
        %1629 = vmatpush1.bf16.msra.mxu0 0
        %1630 = vmatprep.subr.bf16.mxu0 0
        %1631 = vmatpush1.bf16.msra.mxu0 0
        %1632 = vmatprep.subr.bf16.mxu0 0
        %1633 = vmatpush1.bf16.msra.mxu0 0
        %1634 = vmatprep.subr.bf16.mxu0 0
        %1635 = vmatpush1.bf16.msra.mxu0 0
        %1636 = vmatprep.subr.bf16.mxu0 0
        %1637 = vmatpush1.bf16.msra.mxu0 0
        %1638 = vmatprep.subr.bf16.mxu0 0
        %1639 = vmatpush1.bf16.msra.mxu0 0
        %1640 = vmatprep.subr.bf16.mxu0 0
        %1641 = vmatpush1.bf16.msra.mxu0 0
        %1642 = vmatprep.subr.bf16.mxu0 0
        %1643 = vmatpush1.bf16.msra.mxu0 0
        %1644 = vmatprep.subr.bf16.mxu0 0
        %1645 = vmatpush1.bf16.msra.mxu0 0
        %1646 = vmatprep.subr.bf16.mxu0 0
        %1647 = vmatpush1.bf16.msra.mxu0 0
        %1648 = vmatprep.mubr.bf16.mxu0 0
        %1649 = vmatmul.mubr.bf16.gmra.mrb[0].mxu0 %v1566
        %v1650 = vpop.f32.mrb[0].mxu0
        %v1651 = vadd.f32 0.0, %v1650
        %v1652 = vpop.f32.mrb[0].mxu0
        %v1653 = vpop.f32.mrb[0].mxu0
        %v1654 = vadd.f32 0.0, %v1653
        %v1655 = vpop.f32.mrb[0].mxu0
        %1656 = vmatprep.mubr.bf16.mxu0 0
        %1657 = vmatmul.mubr.bf16.gmra.mrb[0].mxu0 %v1569
        %v1658 = vpop.f32.mrb[0].mxu0
        %v1659 = vadd.f32 0.0, %v1658
        %v1660 = vpop.f32.mrb[0].mxu0
        %v1661 = vpop.f32.mrb[0].mxu0
        %v1662 = vadd.f32 0.0, %v1661
        %v1663 = vpop.f32.mrb[0].mxu0
        %1664 = vmatprep.mubr.bf16.mxu0 0
        %1665 = vmatmul.mubr.bf16.gmra.mrb[0].mxu0 %v1572
        %v1666 = vpop.f32.mrb[0].mxu0
        %v1667 = vadd.f32 0.0, %v1666
        %v1668 = vpop.f32.mrb[0].mxu0
        %v1669 = vpop.f32.mrb[0].mxu0
        %v1670 = vadd.f32 0.0, %v1669
        %v1671 = vpop.f32.mrb[0].mxu0
        %1672 = vmatprep.mubr.bf16.mxu0 0
        %1673 = vmatmul.mubr.bf16.gmra.mrb[0].mxu0 %v1575
        %v1674 = vpop.f32.mrb[0].mxu0
        %v1675 = vadd.f32 0.0, %v1674
        %v1676 = vpop.f32.mrb[0].mxu0
        %v1677 = vpop.f32.mrb[0].mxu0
        %v1678 = vadd.f32 0.0, %v1677
        %v1679 = vpop.f32.mrb[0].mxu0
        %1680 = vmatprep.mubr.bf16.mxu0 0
        %1681 = vmatmul.mubr.bf16.gmra.mrb[0].mxu0 %v1578
        %v1682 = vpop.f32.mrb[0].mxu0
        %v1683 = vadd.f32 0.0, %v1682
        %v1684 = vpop.f32.mrb[0].mxu0
        %v1685 = vpop.f32.mrb[0].mxu0
        %v1686 = vadd.f32 0.0, %v1685
        %v1687 = vpop.f32.mrb[0].mxu0
        %1688 = vmatprep.mubr.bf16.mxu0 0
        %1689 = vmatmul.mubr.bf16.gmra.mrb[0].mxu0 %v1581
        %v1690 = vpop.f32.mrb[0].mxu0
        %v1691 = vadd.f32 0.0, %v1690
        %v1692 = vpop.f32.mrb[0].mxu0
        %v1693 = vpop.f32.mrb[0].mxu0
        %v1694 = vadd.f32 0.0, %v1693
        %v1695 = vpop.f32.mrb[0].mxu0
        %1696 = vmatprep.mubr.bf16.mxu0 0
        %1697 = vmatmul.mubr.bf16.gmra.mrb[0].mxu0 %v1584
        %v1698 = vpop.f32.mrb[0].mxu0
        %v1699 = vadd.f32 0.0, %v1698
        %v1700 = vpop.f32.mrb[0].mxu0
        %v1701 = vpop.f32.mrb[0].mxu0
        %v1702 = vadd.f32 0.0, %v1701
        %v1703 = vpop.f32.mrb[0].mxu0
        %1704 = vmatprep.mubr.bf16.mxu0 0
        %1705 = vmatmul.mubr.bf16.gmra.mrb[0].mxu0 %v1587
        %v1706 = vpop.f32.mrb[0].mxu0
        %v1707 = vadd.f32 0.0, %v1706
        %v1708 = vpop.f32.mrb[0].mxu0
        %v1709 = vpop.f32.mrb[0].mxu0
        %v1710 = vadd.f32 0.0, %v1709
        %v1711 = vpop.f32.mrb[0].mxu0
        %1712 = vmatprep.mubr.bf16.mxu0 0
        %1713 = vmatmul.mubr.bf16.gmra.mrb[0].mxu0 %v1590
        %v1714 = vpop.f32.mrb[0].mxu0
        %v1715 = vadd.f32 0.0, %v1714
        %v1716 = vpop.f32.mrb[0].mxu0
        %v1717 = vpop.f32.mrb[0].mxu0
        %v1718 = vadd.f32 0.0, %v1717
        %v1719 = vpop.f32.mrb[0].mxu0
        %1720 = vmatprep.mubr.bf16.mxu0 0
        %1721 = vmatmul.mubr.bf16.gmra.mrb[0].mxu0 %v1593
        %v1722 = vpop.f32.mrb[0].mxu0
        %v1723 = vadd.f32 0.0, %v1722
        %v1724 = vpop.f32.mrb[0].mxu0
        %v1725 = vpop.f32.mrb[0].mxu0
        %v1726 = vadd.f32 0.0, %v1725
        %v1727 = vpop.f32.mrb[0].mxu0
        %1728 = vmatprep.mubr.bf16.mxu0 0
        %1729 = vmatmul.mubr.bf16.gmra.mrb[0].mxu0 %v1596
        %v1730 = vpop.f32.mrb[0].mxu0
        %v1731 = vadd.f32 0.0, %v1730
        %v1732 = vpop.f32.mrb[0].mxu0
        %v1733 = vpop.f32.mrb[0].mxu0
        %v1734 = vadd.f32 0.0, %v1733
        %v1735 = vpop.f32.mrb[0].mxu0
        %1736 = vmatprep.mubr.bf16.mxu0 0
        %1737 = vmatmul.mubr.bf16.gmra.mrb[0].mxu0 %v1599
        %v1738 = vpop.f32.mrb[0].mxu0
        %v1739 = vadd.f32 0.0, %v1738
        %v1740 = vpop.f32.mrb[0].mxu0
        %v1741 = vpop.f32.mrb[0].mxu0
        %v1742 = vadd.f32 0.0, %v1741
        %v1743 = vpop.f32.mrb[0].mxu0
        %1744 = vmatprep.mubr.bf16.mxu0 0
        %1745 = vmatmul.mubr.bf16.gmra.mrb[0].mxu0 %v1602
        %v1746 = vpop.f32.mrb[0].mxu0
        %v1747 = vadd.f32 0.0, %v1746
        %v1748 = vpop.f32.mrb[0].mxu0
        %v1749 = vpop.f32.mrb[0].mxu0
        %v1750 = vadd.f32 0.0, %v1749
        %v1751 = vpop.f32.mrb[0].mxu0
        %1752 = vmatprep.mubr.bf16.mxu0 0
        %1753 = vmatmul.mubr.bf16.gmra.mrb[0].mxu0 %v1605
        %v1754 = vpop.f32.mrb[0].mxu0
        %v1755 = vadd.f32 0.0, %v1754
        %v1756 = vpop.f32.mrb[0].mxu0
        %v1757 = vpop.f32.mrb[0].mxu0
        %v1758 = vadd.f32 0.0, %v1757
        %v1759 = vpop.f32.mrb[0].mxu0
        %1760 = vmatprep.mubr.bf16.mxu0 0
        %1761 = vmatmul.mubr.bf16.gmra.mrb[0].mxu0 %v1608
        %v1762 = vpop.f32.mrb[0].mxu0
        %v1763 = vadd.f32 0.0, %v1762
        %v1764 = vpop.f32.mrb[0].mxu0
        %v1765 = vpop.f32.mrb[0].mxu0
        %v1766 = vadd.f32 0.0, %v1765
        %v1767 = vpop.f32.mrb[0].mxu0
        %1768 = vmatprep.mubr.bf16.mxu0 0
        %1769 = vmatmul.mubr.bf16.gmra.mrb[0].mxu0 %v1611
        %v1770 = vpop.f32.mrb[0].mxu0
        %v1771 = vadd.f32 0.0, %v1770
        %v1772 = vpop.f32.mrb[0].mxu0
        %v1773 = vpop.f32.mrb[0].mxu0
        %v1774 = vadd.f32 0.0, %v1773
        %v1775 = vpop.f32.mrb[0].mxu0
        %1776 = vdwg.mxu0
        %v1777 = vadd.f32 %v1431, %v1651
        %v1778 = vadd.f32 %v1434, %v1654
        %v1779 = vadd.f32 %v1439, %v1659
        %v1780 = vadd.f32 %v1442, %v1662
        %v1781 = vadd.f32 %v1447, %v1667
        %v1782 = vadd.f32 %v1450, %v1670
        %v1783 = vadd.f32 %v1455, %v1675
        %v1784 = vadd.f32 %v1458, %v1678
        %v1785 = vadd.f32 %v1463, %v1683
        %v1786 = vadd.f32 %v1466, %v1686
        %v1787 = vadd.f32 %v1471, %v1691
        %v1788 = vadd.f32 %v1474, %v1694
        %v1789 = vadd.f32 %v1479, %v1699
        %v1790 = vadd.f32 %v1482, %v1702
        %v1791 = vadd.f32 %v1487, %v1707
        %v1792 = vadd.f32 %v1490, %v1710
        %v1793 = vadd.f32 %v1495, %v1715
        %v1794 = vadd.f32 %v1498, %v1718
        %v1795 = vadd.f32 %v1503, %v1723
        %v1796 = vadd.f32 %v1506, %v1726
        %v1797 = vadd.f32 %v1511, %v1731
        %v1798 = vadd.f32 %v1514, %v1734
        %v1799 = vadd.f32 %v1519, %v1739
        %v1800 = vadd.f32 %v1522, %v1742
        %v1801 = vadd.f32 %v1527, %v1747
        %v1802 = vadd.f32 %v1530, %v1750
        %v1803 = vadd.f32 %v1535, %v1755
        %v1804 = vadd.f32 %v1538, %v1758
        %v1805 = vadd.f32 %v1543, %v1763
        %v1806 = vadd.f32 %v1546, %v1766
        %v1807 = vadd.f32 %v1551, %v1771
        %v1808 = vadd.f32 %v1554, %v1774
        %v1809 = vld [vmem:[%s6] sm:$0x1]
        %v1811 = vlaneseq
        %v1812 = vshrl.u32 %v1811, 7
        %v1813 = vsub.s32 0, %v1812
        %v1814 = vrot.slane %v1809, %v1813
        %v1816 = vmul.f32 %v1777, %v1814
        %v1817 = vmul.f32 %v1778, %v1814
        %v1818 = vmul.f32 %v1779, %v1814
        %v1819 = vmul.f32 %v1780, %v1814
        %v1820 = vmul.f32 %v1781, %v1814
        %v1821 = vmul.f32 %v1782, %v1814
        %v1822 = vmul.f32 %v1783, %v1814
        %v1823 = vmul.f32 %v1784, %v1814
        %v1824 = vmul.f32 %v1785, %v1814
        %v1825 = vmul.f32 %v1786, %v1814
        %v1826 = vmul.f32 %v1787, %v1814
        %v1827 = vmul.f32 %v1788, %v1814
        %v1828 = vmul.f32 %v1789, %v1814
        %v1829 = vmul.f32 %v1790, %v1814
        %v1830 = vmul.f32 %v1791, %v1814
        %v1831 = vmul.f32 %v1792, %v1814
        %v1832 = vmul.f32 %v1793, %v1814
        %v1833 = vmul.f32 %v1794, %v1814
        %v1834 = vmul.f32 %v1795, %v1814
        %v1835 = vmul.f32 %v1796, %v1814
        %v1836 = vmul.f32 %v1797, %v1814
        %v1837 = vmul.f32 %v1798, %v1814
        %v1838 = vmul.f32 %v1799, %v1814
        %v1839 = vmul.f32 %v1800, %v1814
        %v1840 = vmul.f32 %v1801, %v1814
        %v1841 = vmul.f32 %v1802, %v1814
        %v1842 = vmul.f32 %v1803, %v1814
        %v1843 = vmul.f32 %v1804, %v1814
        %v1844 = vmul.f32 %v1805, %v1814
        %v1845 = vmul.f32 %v1806, %v1814
        %v1846 = vmul.f32 %v1807, %v1814
        %v1847 = vmul.f32 %v1808, %v1814
        %v1848 = vld [vmem:[%s7] sm:$0x1]
        %v1850 = vlaneseq
        %v1851 = vshrl.u32 %v1850, 7
        %v1852 = vsub.s32 0, %v1851
        %v1853 = vrot.slane %v1848, %v1852
        %v1855 = vadd.f32 %v1816, %v1853
        %v1856 = vadd.f32 %v1817, %v1853
        %v1857 = vadd.f32 %v1818, %v1853
        %v1858 = vadd.f32 %v1819, %v1853
        %v1859 = vadd.f32 %v1820, %v1853
        %v1860 = vadd.f32 %v1821, %v1853
        %v1861 = vadd.f32 %v1822, %v1853
        %v1862 = vadd.f32 %v1823, %v1853
        %v1863 = vadd.f32 %v1824, %v1853
        %v1864 = vadd.f32 %v1825, %v1853
        %v1865 = vadd.f32 %v1826, %v1853
        %v1866 = vadd.f32 %v1827, %v1853
        %v1867 = vadd.f32 %v1828, %v1853
        %v1868 = vadd.f32 %v1829, %v1853
        %v1869 = vadd.f32 %v1830, %v1853
        %v1870 = vadd.f32 %v1831, %v1853
        %v1871 = vadd.f32 %v1832, %v1853
        %v1872 = vadd.f32 %v1833, %v1853
        %v1873 = vadd.f32 %v1834, %v1853
        %v1874 = vadd.f32 %v1835, %v1853
        %v1875 = vadd.f32 %v1836, %v1853
        %v1876 = vadd.f32 %v1837, %v1853
        %v1877 = vadd.f32 %v1838, %v1853
        %v1878 = vadd.f32 %v1839, %v1853
        %v1879 = vadd.f32 %v1840, %v1853
        %v1880 = vadd.f32 %v1841, %v1853
        %v1881 = vadd.f32 %v1842, %v1853
        %v1882 = vadd.f32 %v1843, %v1853
        %v1883 = vadd.f32 %v1844, %v1853
        %v1884 = vadd.f32 %v1845, %v1853
        %v1885 = vadd.f32 %v1846, %v1853
        %v1886 = vadd.f32 %v1847, %v1853
        %v1887 = vmax.f32 %v1855, 0.0
        %v1888 = vmax.f32 %v1856, 0.0
        %v1889 = vmax.f32 %v1857, 0.0
        %v1890 = vmax.f32 %v1858, 0.0
        %v1891 = vmax.f32 %v1859, 0.0
        %v1892 = vmax.f32 %v1860, 0.0
        %v1893 = vmax.f32 %v1861, 0.0
        %v1894 = vmax.f32 %v1862, 0.0
        %v1895 = vmax.f32 %v1863, 0.0
        %v1896 = vmax.f32 %v1864, 0.0
        %v1897 = vmax.f32 %v1865, 0.0
        %v1898 = vmax.f32 %v1866, 0.0
        %v1899 = vmax.f32 %v1867, 0.0
        %v1900 = vmax.f32 %v1868, 0.0
        %v1901 = vmax.f32 %v1869, 0.0
        %v1902 = vmax.f32 %v1870, 0.0
        %v1903 = vmax.f32 %v1871, 0.0
        %v1904 = vmax.f32 %v1872, 0.0
        %v1905 = vmax.f32 %v1873, 0.0
        %v1906 = vmax.f32 %v1874, 0.0
        %v1907 = vmax.f32 %v1875, 0.0
        %v1908 = vmax.f32 %v1876, 0.0
        %v1909 = vmax.f32 %v1877, 0.0
        %v1910 = vmax.f32 %v1878, 0.0
        %v1911 = vmax.f32 %v1879, 0.0
        %v1912 = vmax.f32 %v1880, 0.0
        %v1913 = vmax.f32 %v1881, 0.0
        %v1914 = vmax.f32 %v1882, 0.0
        %v1915 = vmax.f32 %v1883, 0.0
        %v1916 = vmax.f32 %v1884, 0.0
        %v1917 = vmax.f32 %v1885, 0.0
        %v1918 = vmax.f32 %v1886, 0.0
        %v1919 = vpack.c.bf16 %v1888, %v1887
        %v1920 = vpack.c.bf16 %v1890, %v1889
        %v1921 = vpack.c.bf16 %v1892, %v1891
        %v1922 = vpack.c.bf16 %v1894, %v1893
        %v1923 = vpack.c.bf16 %v1896, %v1895
        %v1924 = vpack.c.bf16 %v1898, %v1897
        %v1925 = vpack.c.bf16 %v1900, %v1899
        %v1926 = vpack.c.bf16 %v1902, %v1901
        %v1927 = vpack.c.bf16 %v1904, %v1903
        %v1928 = vpack.c.bf16 %v1906, %v1905
        %v1929 = vpack.c.bf16 %v1908, %v1907
        %v1930 = vpack.c.bf16 %v1910, %v1909
        %v1931 = vpack.c.bf16 %v1912, %v1911
        %v1932 = vpack.c.bf16 %v1914, %v1913
        %v1933 = vpack.c.bf16 %v1916, %v1915
        %v1934 = vpack.c.bf16 %v1918, %v1917
        %v1935 = vld [vmem:[%s3] sm:$0x3]
        %v1937 = vsel %vm852, %v1919, 0
        %v1940 = vsel %vm852, %v1920, 0
        %v1943 = vsel %vm852, %v1921, 0
        %v1946 = vsel %vm852, %v1922, 0
        %v1949 = vsel %vm852, %v1923, 0
        %v1952 = vsel %vm852, %v1924, 0
        %v1955 = vsel %vm852, %v1925, 0
        %v1958 = vsel %vm852, %v1926, 0
        %v1961 = vsel %vm852, %v1927, 0
        %v1964 = vsel %vm852, %v1928, 0
        %v1967 = vsel %vm852, %v1929, 0
        %v1970 = vsel %vm852, %v1930, 0
        %v1973 = vsel %vm852, %v1931, 0
        %v1976 = vsel %vm852, %v1932, 0
        %v1979 = vsel %vm852, %v1933, 0
        %v1982 = vsel %vm852, %v1934, 0
        %vm1984 = vcmask 1041408
        %v1986 = vsel %vm1984, %v1935, 0
        %1988 = vmatprep.subr.bf16.mxu0 0
        %1989 = vmatpush1.bf16.msra.mxu0 %v1986
        %1990 = vmatprep.subr.bf16.mxu0 0
        %1991 = vmatpush1.bf16.msra.mxu0 0
        %1992 = vmatprep.subr.bf16.mxu0 0
        %1993 = vmatpush1.bf16.msra.mxu0 0
        %1994 = vmatprep.subr.bf16.mxu0 0
        %1995 = vmatpush1.bf16.msra.mxu0 0
        %1996 = vmatprep.subr.bf16.mxu0 0
        %1997 = vmatpush1.bf16.msra.mxu0 0
        %1998 = vmatprep.subr.bf16.mxu0 0
        %1999 = vmatpush1.bf16.msra.mxu0 0
        %2000 = vmatprep.subr.bf16.mxu0 0
        %2001 = vmatpush1.bf16.msra.mxu0 0
        %2002 = vmatprep.subr.bf16.mxu0 0
        %2003 = vmatpush1.bf16.msra.mxu0 0
        %2004 = vmatprep.subr.bf16.mxu0 0
        %2005 = vmatpush1.bf16.msra.mxu0 0
        %2006 = vmatprep.subr.bf16.mxu0 0
        %2007 = vmatpush1.bf16.msra.mxu0 0
        %2008 = vmatprep.subr.bf16.mxu0 0
        %2009 = vmatpush1.bf16.msra.mxu0 0
        %2010 = vmatprep.subr.bf16.mxu0 0
        %2011 = vmatpush1.bf16.msra.mxu0 0
        %2012 = vmatprep.subr.bf16.mxu0 0
        %2013 = vmatpush1.bf16.msra.mxu0 0
        %2014 = vmatprep.subr.bf16.mxu0 0
        %2015 = vmatpush1.bf16.msra.mxu0 0
        %2016 = vmatprep.subr.bf16.mxu0 0
        %2017 = vmatpush1.bf16.msra.mxu0 0
        %2018 = vmatprep.subr.bf16.mxu0 0
        %2019 = vmatpush1.bf16.msra.mxu0 0
        %2020 = vmatprep.mubr.bf16.mxu0 0
        %2021 = vmatmul.mubr.bf16.gmra.mrb[0].mxu0 %v1937
        %v2022 = vpop.f32.mrb[0].mxu0
        %v2023 = vadd.f32 0.0, %v2022
        %v2024 = vpop.f32.mrb[0].mxu0
        %v2025 = vpop.f32.mrb[0].mxu0
        %v2026 = vadd.f32 0.0, %v2025
        %v2027 = vpop.f32.mrb[0].mxu0
        %2028 = vmatprep.mubr.bf16.mxu0 0
        %2029 = vmatmul.mubr.bf16.gmra.mrb[0].mxu0 %v1940
        %v2030 = vpop.f32.mrb[0].mxu0
        %v2031 = vadd.f32 0.0, %v2030
        %v2032 = vpop.f32.mrb[0].mxu0
        %v2033 = vpop.f32.mrb[0].mxu0
        %v2034 = vadd.f32 0.0, %v2033
        %v2035 = vpop.f32.mrb[0].mxu0
        %2036 = vmatprep.mubr.bf16.mxu0 0
        %2037 = vmatmul.mubr.bf16.gmra.mrb[0].mxu0 %v1943
        %v2038 = vpop.f32.mrb[0].mxu0
        %v2039 = vadd.f32 0.0, %v2038
        %v2040 = vpop.f32.mrb[0].mxu0
        %v2041 = vpop.f32.mrb[0].mxu0
        %v2042 = vadd.f32 0.0, %v2041
        %v2043 = vpop.f32.mrb[0].mxu0
        %2044 = vmatprep.mubr.bf16.mxu0 0
        %2045 = vmatmul.mubr.bf16.gmra.mrb[0].mxu0 %v1946
        %v2046 = vpop.f32.mrb[0].mxu0
        %v2047 = vadd.f32 0.0, %v2046
        %v2048 = vpop.f32.mrb[0].mxu0
        %v2049 = vpop.f32.mrb[0].mxu0
        %v2050 = vadd.f32 0.0, %v2049
        %v2051 = vpop.f32.mrb[0].mxu0
        %2052 = vmatprep.mubr.bf16.mxu0 0
        %2053 = vmatmul.mubr.bf16.gmra.mrb[0].mxu0 %v1949
        %v2054 = vpop.f32.mrb[0].mxu0
        %v2055 = vadd.f32 0.0, %v2054
        %v2056 = vpop.f32.mrb[0].mxu0
        %v2057 = vpop.f32.mrb[0].mxu0
        %v2058 = vadd.f32 0.0, %v2057
        %v2059 = vpop.f32.mrb[0].mxu0
        %2060 = vmatprep.mubr.bf16.mxu0 0
        %2061 = vmatmul.mubr.bf16.gmra.mrb[0].mxu0 %v1952
        %v2062 = vpop.f32.mrb[0].mxu0
        %v2063 = vadd.f32 0.0, %v2062
        %v2064 = vpop.f32.mrb[0].mxu0
        %v2065 = vpop.f32.mrb[0].mxu0
        %v2066 = vadd.f32 0.0, %v2065
        %v2067 = vpop.f32.mrb[0].mxu0
        %2068 = vmatprep.mubr.bf16.mxu0 0
        %2069 = vmatmul.mubr.bf16.gmra.mrb[0].mxu0 %v1955
        %v2070 = vpop.f32.mrb[0].mxu0
        %v2071 = vadd.f32 0.0, %v2070
        %v2072 = vpop.f32.mrb[0].mxu0
        %v2073 = vpop.f32.mrb[0].mxu0
        %v2074 = vadd.f32 0.0, %v2073
        %v2075 = vpop.f32.mrb[0].mxu0
        %2076 = vmatprep.mubr.bf16.mxu0 0
        %2077 = vmatmul.mubr.bf16.gmra.mrb[0].mxu0 %v1958
        %v2078 = vpop.f32.mrb[0].mxu0
        %v2079 = vadd.f32 0.0, %v2078
        %v2080 = vpop.f32.mrb[0].mxu0
        %v2081 = vpop.f32.mrb[0].mxu0
        %v2082 = vadd.f32 0.0, %v2081
        %v2083 = vpop.f32.mrb[0].mxu0
        %2084 = vmatprep.mubr.bf16.mxu0 0
        %2085 = vmatmul.mubr.bf16.gmra.mrb[0].mxu0 %v1961
        %v2086 = vpop.f32.mrb[0].mxu0
        %v2087 = vadd.f32 0.0, %v2086
        %v2088 = vpop.f32.mrb[0].mxu0
        %v2089 = vpop.f32.mrb[0].mxu0
        %v2090 = vadd.f32 0.0, %v2089
        %v2091 = vpop.f32.mrb[0].mxu0
        %2092 = vmatprep.mubr.bf16.mxu0 0
        %2093 = vmatmul.mubr.bf16.gmra.mrb[0].mxu0 %v1964
        %v2094 = vpop.f32.mrb[0].mxu0
        %v2095 = vadd.f32 0.0, %v2094
        %v2096 = vpop.f32.mrb[0].mxu0
        %v2097 = vpop.f32.mrb[0].mxu0
        %v2098 = vadd.f32 0.0, %v2097
        %v2099 = vpop.f32.mrb[0].mxu0
        %2100 = vmatprep.mubr.bf16.mxu0 0
        %2101 = vmatmul.mubr.bf16.gmra.mrb[0].mxu0 %v1967
        %v2102 = vpop.f32.mrb[0].mxu0
        %v2103 = vadd.f32 0.0, %v2102
        %v2104 = vpop.f32.mrb[0].mxu0
        %v2105 = vpop.f32.mrb[0].mxu0
        %v2106 = vadd.f32 0.0, %v2105
        %v2107 = vpop.f32.mrb[0].mxu0
        %2108 = vmatprep.mubr.bf16.mxu0 0
        %2109 = vmatmul.mubr.bf16.gmra.mrb[0].mxu0 %v1970
        %v2110 = vpop.f32.mrb[0].mxu0
        %v2111 = vadd.f32 0.0, %v2110
        %v2112 = vpop.f32.mrb[0].mxu0
        %v2113 = vpop.f32.mrb[0].mxu0
        %v2114 = vadd.f32 0.0, %v2113
        %v2115 = vpop.f32.mrb[0].mxu0
        %2116 = vmatprep.mubr.bf16.mxu0 0
        %2117 = vmatmul.mubr.bf16.gmra.mrb[0].mxu0 %v1973
        %v2118 = vpop.f32.mrb[0].mxu0
        %v2119 = vadd.f32 0.0, %v2118
        %v2120 = vpop.f32.mrb[0].mxu0
        %v2121 = vpop.f32.mrb[0].mxu0
        %v2122 = vadd.f32 0.0, %v2121
        %v2123 = vpop.f32.mrb[0].mxu0
        %2124 = vmatprep.mubr.bf16.mxu0 0
        %2125 = vmatmul.mubr.bf16.gmra.mrb[0].mxu0 %v1976
        %v2126 = vpop.f32.mrb[0].mxu0
        %v2127 = vadd.f32 0.0, %v2126
        %v2128 = vpop.f32.mrb[0].mxu0
        %v2129 = vpop.f32.mrb[0].mxu0
        %v2130 = vadd.f32 0.0, %v2129
        %v2131 = vpop.f32.mrb[0].mxu0
        %2132 = vmatprep.mubr.bf16.mxu0 0
        %2133 = vmatmul.mubr.bf16.gmra.mrb[0].mxu0 %v1979
        %v2134 = vpop.f32.mrb[0].mxu0
        %v2135 = vadd.f32 0.0, %v2134
        %v2136 = vpop.f32.mrb[0].mxu0
        %v2137 = vpop.f32.mrb[0].mxu0
        %v2138 = vadd.f32 0.0, %v2137
        %v2139 = vpop.f32.mrb[0].mxu0
        %2140 = vmatprep.mubr.bf16.mxu0 0
        %2141 = vmatmul.mubr.bf16.gmra.mrb[0].mxu0 %v1982
        %v2142 = vpop.f32.mrb[0].mxu0
        %v2143 = vadd.f32 0.0, %v2142
        %v2144 = vpop.f32.mrb[0].mxu0
        %v2145 = vpop.f32.mrb[0].mxu0
        %v2146 = vadd.f32 0.0, %v2145
        %v2147 = vpop.f32.mrb[0].mxu0
        %2148 = vdwg.mxu0
        %v2149 = vld [vmem:[%s8] sm:$0x1]
        %v2151 = vlaneseq
        %v2152 = vshrl.u32 %v2151, 7
        %v2153 = vsub.s32 0, %v2152
        %v2154 = vrot.slane %v2149, %v2153
        %v2156 = vmul.f32 %v2023, %v2154
        %v2157 = vmul.f32 %v2026, %v2154
        %v2158 = vmul.f32 %v2031, %v2154
        %v2159 = vmul.f32 %v2034, %v2154
        %v2160 = vmul.f32 %v2039, %v2154
        %v2161 = vmul.f32 %v2042, %v2154
        %v2162 = vmul.f32 %v2047, %v2154
        %v2163 = vmul.f32 %v2050, %v2154
        %v2164 = vmul.f32 %v2055, %v2154
        %v2165 = vmul.f32 %v2058, %v2154
        %v2166 = vmul.f32 %v2063, %v2154
        %v2167 = vmul.f32 %v2066, %v2154
        %v2168 = vmul.f32 %v2071, %v2154
        %v2169 = vmul.f32 %v2074, %v2154
        %v2170 = vmul.f32 %v2079, %v2154
        %v2171 = vmul.f32 %v2082, %v2154
        %v2172 = vmul.f32 %v2087, %v2154
        %v2173 = vmul.f32 %v2090, %v2154
        %v2174 = vmul.f32 %v2095, %v2154
        %v2175 = vmul.f32 %v2098, %v2154
        %v2176 = vmul.f32 %v2103, %v2154
        %v2177 = vmul.f32 %v2106, %v2154
        %v2178 = vmul.f32 %v2111, %v2154
        %v2179 = vmul.f32 %v2114, %v2154
        %v2180 = vmul.f32 %v2119, %v2154
        %v2181 = vmul.f32 %v2122, %v2154
        %v2182 = vmul.f32 %v2127, %v2154
        %v2183 = vmul.f32 %v2130, %v2154
        %v2184 = vmul.f32 %v2135, %v2154
        %v2185 = vmul.f32 %v2138, %v2154
        %v2186 = vmul.f32 %v2143, %v2154
        %v2187 = vmul.f32 %v2146, %v2154
        %v2188 = vld [vmem:[%s9] sm:$0x1]
        %v2190 = vlaneseq
        %v2191 = vshrl.u32 %v2190, 7
        %v2192 = vsub.s32 0, %v2191
        %v2193 = vrot.slane %v2188, %v2192
        %v2195 = vadd.f32 %v2156, %v2193
        %v2196 = vadd.f32 %v2157, %v2193
        %v2197 = vadd.f32 %v2158, %v2193
        %v2198 = vadd.f32 %v2159, %v2193
        %v2199 = vadd.f32 %v2160, %v2193
        %v2200 = vadd.f32 %v2161, %v2193
        %v2201 = vadd.f32 %v2162, %v2193
        %v2202 = vadd.f32 %v2163, %v2193
        %v2203 = vadd.f32 %v2164, %v2193
        %v2204 = vadd.f32 %v2165, %v2193
        %v2205 = vadd.f32 %v2166, %v2193
        %v2206 = vadd.f32 %v2167, %v2193
        %v2207 = vadd.f32 %v2168, %v2193
        %v2208 = vadd.f32 %v2169, %v2193
        %v2209 = vadd.f32 %v2170, %v2193
        %v2210 = vadd.f32 %v2171, %v2193
        %v2211 = vadd.f32 %v2172, %v2193
        %v2212 = vadd.f32 %v2173, %v2193
        %v2213 = vadd.f32 %v2174, %v2193
        %v2214 = vadd.f32 %v2175, %v2193
        %v2215 = vadd.f32 %v2176, %v2193
        %v2216 = vadd.f32 %v2177, %v2193
        %v2217 = vadd.f32 %v2178, %v2193
        %v2218 = vadd.f32 %v2179, %v2193
        %v2219 = vadd.f32 %v2180, %v2193
        %v2220 = vadd.f32 %v2181, %v2193
        %v2221 = vadd.f32 %v2182, %v2193
        %v2222 = vadd.f32 %v2183, %v2193
        %v2223 = vadd.f32 %v2184, %v2193
        %v2224 = vadd.f32 %v2185, %v2193
        %v2225 = vadd.f32 %v2186, %v2193
        %v2226 = vadd.f32 %v2187, %v2193
        %v2227 = vadd.f32 %v2195, %v379
        %v2228 = vadd.f32 %v2196, %v380
        %v2229 = vadd.f32 %v2197, %v381
        %v2230 = vadd.f32 %v2198, %v382
        %v2231 = vadd.f32 %v2199, %v383
        %v2232 = vadd.f32 %v2200, %v384
        %v2233 = vadd.f32 %v2201, %v385
        %v2234 = vadd.f32 %v2202, %v386
        %v2235 = vadd.f32 %v2203, %v387
        %v2236 = vadd.f32 %v2204, %v388
        %v2237 = vadd.f32 %v2205, %v389
        %v2238 = vadd.f32 %v2206, %v390
        %v2239 = vadd.f32 %v2207, %v391
        %v2240 = vadd.f32 %v2208, %v392
        %v2241 = vadd.f32 %v2209, %v393
        %v2242 = vadd.f32 %v2210, %v394
        %v2243 = vadd.f32 %v2211, %v395
        %v2244 = vadd.f32 %v2212, %v396
        %v2245 = vadd.f32 %v2213, %v397
        %v2246 = vadd.f32 %v2214, %v398
        %v2247 = vadd.f32 %v2215, %v399
        %v2248 = vadd.f32 %v2216, %v400
        %v2249 = vadd.f32 %v2217, %v401
        %v2250 = vadd.f32 %v2218, %v402
        %v2251 = vadd.f32 %v2219, %v403
        %v2252 = vadd.f32 %v2220, %v404
        %v2253 = vadd.f32 %v2221, %v405
        %v2254 = vadd.f32 %v2222, %v406
        %v2255 = vadd.f32 %v2223, %v407
        %v2256 = vadd.f32 %v2224, %v408
        %v2257 = vadd.f32 %v2225, %v409
        %v2258 = vadd.f32 %v2226, %v410
        %v2259 = vmax.f32 %v2227, 0.0
        %v2260 = vmax.f32 %v2228, 0.0
        %v2261 = vmax.f32 %v2229, 0.0
        %v2262 = vmax.f32 %v2230, 0.0
        %v2263 = vmax.f32 %v2231, 0.0
        %v2264 = vmax.f32 %v2232, 0.0
        %v2265 = vmax.f32 %v2233, 0.0
        %v2266 = vmax.f32 %v2234, 0.0
        %v2267 = vmax.f32 %v2235, 0.0
        %v2268 = vmax.f32 %v2236, 0.0
        %v2269 = vmax.f32 %v2237, 0.0
        %v2270 = vmax.f32 %v2238, 0.0
        %v2271 = vmax.f32 %v2239, 0.0
        %v2272 = vmax.f32 %v2240, 0.0
        %v2273 = vmax.f32 %v2241, 0.0
        %v2274 = vmax.f32 %v2242, 0.0
        %v2275 = vmax.f32 %v2243, 0.0
        %v2276 = vmax.f32 %v2244, 0.0
        %v2277 = vmax.f32 %v2245, 0.0
        %v2278 = vmax.f32 %v2246, 0.0
        %v2279 = vmax.f32 %v2247, 0.0
        %v2280 = vmax.f32 %v2248, 0.0
        %v2281 = vmax.f32 %v2249, 0.0
        %v2282 = vmax.f32 %v2250, 0.0
        %v2283 = vmax.f32 %v2251, 0.0
        %v2284 = vmax.f32 %v2252, 0.0
        %v2285 = vmax.f32 %v2253, 0.0
        %v2286 = vmax.f32 %v2254, 0.0
        %v2287 = vmax.f32 %v2255, 0.0
        %v2288 = vmax.f32 %v2256, 0.0
        %v2289 = vmax.f32 %v2257, 0.0
        %v2290 = vmax.f32 %v2258, 0.0
        %2291 = vst.msk [vmem:[%s377] sm:$0xff] %vm435, %v2259
        %2292 = vst.msk [vmem:[%s377 + $0x8] sm:$0xff] %vm435, %v2260
        %2293 = vst.msk [vmem:[%s377 + $0x10] sm:$0xff] %vm435, %v2261
        %2294 = vst.msk [vmem:[%s377 + $0x18] sm:$0xff] %vm435, %v2262
        %2295 = vst.msk [vmem:[%s377 + $0x20] sm:$0xff] %vm435, %v2263
        %2296 = vst.msk [vmem:[%s377 + $0x28] sm:$0xff] %vm435, %v2264
        %2297 = vst.msk [vmem:[%s377 + $0x30] sm:$0xff] %vm435, %v2265
        %2298 = vst.msk [vmem:[%s377 + $0x38] sm:$0xff] %vm435, %v2266
        %2299 = vst.msk [vmem:[%s377 + $0x40] sm:$0xff] %vm435, %v2267
        %2300 = vst.msk [vmem:[%s377 + $0x48] sm:$0xff] %vm435, %v2268
        %2301 = vst.msk [vmem:[%s377 + $0x50] sm:$0xff] %vm435, %v2269
        %2302 = vst.msk [vmem:[%s377 + $0x58] sm:$0xff] %vm435, %v2270
        %2303 = vst.msk [vmem:[%s377 + $0x60] sm:$0xff] %vm435, %v2271
        %2304 = vst.msk [vmem:[%s377 + $0x68] sm:$0xff] %vm435, %v2272
        %2305 = vst.msk [vmem:[%s377 + $0x70] sm:$0xff] %vm435, %v2273
        %2306 = vst.msk [vmem:[%s377 + $0x78] sm:$0xff] %vm435, %v2274
        %2307 = vst.msk [vmem:[%s377 + $0x80] sm:$0xff] %vm435, %v2275
        %2308 = vst.msk [vmem:[%s377 + $0x88] sm:$0xff] %vm435, %v2276
        %2309 = vst.msk [vmem:[%s377 + $0x90] sm:$0xff] %vm435, %v2277
        %2310 = vst.msk [vmem:[%s377 + $0x98] sm:$0xff] %vm435, %v2278
        %2311 = vst.msk [vmem:[%s377 + $0xa0] sm:$0xff] %vm435, %v2279
        %2312 = vst.msk [vmem:[%s377 + $0xa8] sm:$0xff] %vm435, %v2280
        %2313 = vst.msk [vmem:[%s377 + $0xb0] sm:$0xff] %vm435, %v2281
        %2314 = vst.msk [vmem:[%s377 + $0xb8] sm:$0xff] %vm435, %v2282
        %2315 = vst.msk [vmem:[%s377 + $0xc0] sm:$0xff] %vm435, %v2283
        %2316 = vst.msk [vmem:[%s377 + $0xc8] sm:$0xff] %vm435, %v2284
        %2317 = vst.msk [vmem:[%s377 + $0xd0] sm:$0xff] %vm435, %v2285
        %2318 = vst.msk [vmem:[%s377 + $0xd8] sm:$0xff] %vm435, %v2286
        %2319 = vst.msk [vmem:[%s377 + $0xe0] sm:$0xff] %vm435, %v2287
        %2320 = vst.msk [vmem:[%s377 + $0xe8] sm:$0xff] %vm435, %v2288
        %2321 = vst.msk [vmem:[%s377 + $0xf0] sm:$0xff] %vm435, %v2289
        %2322 = vst.msk [vmem:[%s377 + $0xf8] sm:$0xff] %vm435, %v2290
        %s2323 = sand.u32 %s250, 1
        %s2324 = scalar_lea.sflag [#allocation4], %s2323
        %s2325 = sand.u32 %s250, 1
        %s2326 = smul.addr %s2325, 256
        %s2327 = scalar_lea.vmem [#allocation5], %s2326
        // Predicated region
        $region65: #{tpu_custom_call.1} parent=59 // pred_check
          %p2328 = pneg %p260
        $region66: #{tpu_custom_call.1} parent=59 // pred_check_branch
          %2330 = sbr.rel (%p2328) target = $region68
        $region67: #{tpu_custom_call.1} parent=59 // pred_region
          %s2332 = ssub.s32 4096, 4096
          %2333 = vsyncadd %s2324, %s2332
          %s2334 = smul.addr %s27, 32
          %s2335 = smul.addr %s2334, 128
          %s2336 = scalar_lea.hbm %s10, %s2335
          %s2337 = sshll.u32 %s2327, 4
          %s2338 = int_to_ptr.vmem [resolvable:$true] %s2337
          %2343 = dma.vmem_to_hbm [thread:$0]  %s2338, 4096, %s2336, %s2324, 128, 128, 8
        $region68: #{tpu_custom_call.1} parent=59 // pred_fallthru
          _
      $region60: #{tpu_custom_call.1} parent=5 // pred_fallthru
        _
      %p2344 = scmp.le.s32.totalorder 2, %s22
      // Predicated region
      $region69: #{tpu_custom_call.1} parent=5 // pred_check
        %p2345 = pneg %p2344
      $region70: #{tpu_custom_call.1} parent=5 // pred_check_branch
        %2347 = sbr.rel (%p2345) target = $region72
      $region71: #{tpu_custom_call.1} parent=5 // pred_region
        %s2348 = ssub.s32 %s22, 2
        // Predicated region
        $region73: #{tpu_custom_call.1} parent=71 // pred_check
          %p2349 = pneg %p266
        $region74: #{tpu_custom_call.1} parent=71 // pred_check_branch
          %2351 = sbr.rel (%p2349) target = $region76
        $region75: #{tpu_custom_call.1} parent=71 // pred_region
          %s2352 = sand.u32 %s251, 1
          %s2353 = scalar_lea.sflag [#allocation4], %s2352
          %s2354 = sand.u32 %s251, 1
          %s2355 = smul.addr %s2354, 256
          %s2356 = scalar_lea.vmem [#allocation5], %s2355
          %2357 = dma.done %s2353, 4096
        $region76: #{tpu_custom_call.1} parent=71 // pred_fallthru
          _
      $region72: #{tpu_custom_call.1} parent=5 // pred_fallthru
        _
    $region6: #{tpu_custom_call.1} parent=1 // loop_footer
      %s26 = sadd.s32 1, %s22
    $region7: #{tpu_custom_call.1} parent=1 // loop_footer_branch
      %21 = sbr.rel target = $region3
    $region8: #{tpu_custom_call.1} parent=1 // loop_exit
      _
    %2358 = vsyncpa [#allocation3], 1
    %s2359 = scalar_lea.sflag [#allocation3], 1
    %2360 = vsyncpa %s2359, 1
    %2361 = vsyncpa [#allocation4], 1
    %s2362 = scalar_lea.sflag [#allocation4], 1
    %2363 = vsyncpa %s2362, 1

</llo_original>
